<compile_context>
chip_gen: v6e
topology: v6e:2x2x1
jax: 0.10.0
libtpu: 0.0.40
codegen_flags: <defaults>
</compile_context>

<pallas_src>
import math

import jax
import jax.numpy as jnp
from jax import lax
from jax.experimental import pallas as pl
from jax.experimental.pallas import tpu as pltpu


# Lane-width target for the packed head slabs: multiple of 128 (v5e MXU /
# lane tile) and of 256 (v6e / v7x 256-wide MXU).
_LANE_TARGET = 256


def _round_up(x: int, m: int) -> int:
    return -(-x // m) * m


# ----------------------------------------------------------------------------
# Kernel: one grid step == one head-chunk.
#   UH      = U @ [H_0 | H_1 | ... | 0-pad]          (n, c_pad)   MXU
#   A       = UH (x) blockdiag(U)  (contract dim 1)  (n, c_pad)   MXU
#   stoq    = -|A|                                    lane-dense store
#   neg     = sum(A + |A|)  ( == sum|A - stoq(A)| )   per-chunk scalar
# blockdiag(U) is built in VMEM scratch (or is just U when the chunk holds a
# single head), never materialized in HBM.
# ----------------------------------------------------------------------------
def _make_mel_kernel(n: int, kc: int, c_pad: int, needs_bd: bool):
    def kernel(u_ref, hw_ref, stoq_ref, neg_ref, *scratch):
        U = u_ref[...]                                             # (n, n)

        # One lane-dense MXU matmul for every head in the chunk.
        UH = jnp.dot(U, hw_ref[...],
                     preferred_element_type=jnp.float32)           # (n, c_pad)

        if needs_bd:
            # Build blockdiag(U) on-chip: zero fill + kc static sub-block
            # stores (VPU / vector-store work only, no HBM traffic).
            ubd_ref = scratch[0]
            ubd_ref[...] = jnp.zeros_like(ubd_ref)
            for i in range(kc):                                    # static unroll
                ubd_ref[i * n:(i + 1) * n, i * n:(i + 1) * n] = U
            rhs = ubd_ref[...]                                     # (c_pad, c_pad)
        else:
            # Single head per chunk (n == c_pad): contract directly against U.
            rhs = U

        # A[:, i*n:(i+1)*n] = (U @ H_i) @ U^T.  Contracting dim 1 of the RHS
        # (an NT matmul) avoids any in-kernel transpose.
        A = lax.dot_general(UH, rhs,
                            dimension_numbers=(((1,), (1,)), ((), ())),
                            preferred_element_type=jnp.float32)    # (n, c_pad)

        absA = jnp.abs(A)
        stoq_ref[...] = (-absA).astype(stoq_ref.dtype)             # stoquastic
        # |A - stoquastic(A)| = A + |A| >= 0 elementwise; padded heads / padded
        # lanes are exact zeros so they contribute nothing.
        neg_ref[...] = jnp.sum(A + absA).reshape(1, 1, 1).astype(neg_ref.dtype)

    return kernel


def _build_mel_call(n: int, kc: int, c_pad: int, num_chunks: int, needs_bd: bool):
    kernel = _make_mel_kernel(n, kc, c_pad, needs_bd)
    scratch_shapes = (
        [pltpu.VMEM((c_pad, c_pad), jnp.float32)] if needs_bd else []
    )
    return pl.pallas_call(
        kernel,
        out_shape=(
            jax.ShapeDtypeStruct((n, num_chunks * c_pad), jnp.float32),   # stoq slab
            jax.ShapeDtypeStruct((num_chunks, 1, 1), jnp.float32),        # per-chunk neg
        ),
        grid_spec=pltpu.PrefetchScalarGridSpec(
            num_scalar_prefetch=0,
            grid=(num_chunks,),
            in_specs=[
                # U: same block every chunk -> stays resident, no re-DMA.
                pl.BlockSpec((n, n), lambda c: (0, 0)),
                # Packed-H slab for this chunk (lane width c_pad, mult. of 128).
                pl.BlockSpec((n, c_pad), lambda c: (0, c)),
            ],
            out_specs=(
                pl.BlockSpec((n, c_pad), lambda c: (0, c)),
                pl.BlockSpec((1, 1, 1), lambda c: (c, 0, 0)),
            ),
            scratch_shapes=scratch_shapes,
        ),
        compiler_params=pltpu.CompilerParams(
            # Chunks are independent -> "parallel" (shardable across v7x's two
            # TensorCores; harmless on single-TC v5e/v6e).
            dimension_semantics=("parallel",),
        ),
    )


class MinimumEnergyLossPallas:
    """JAX/Pallas re-implementation of rms_torch.MinimumEnergyLoss (forward)."""

    def __init__(self, h_tensor, decay: float = math.inf, dtype=jnp.float32):
        if decay <= 0:
            raise ValueError("decay should be strictly positive.")
        h_tensor = jnp.asarray(h_tensor, dtype=dtype)
        num_h, n, _ = h_tensor.shape
        # Hermiticity check (real symmetric here). Host-side, init only.
        if not bool(jnp.allclose(h_tensor, jnp.swapaxes(h_tensor, -1, -2),
                                 atol=1e-5)):
            raise ValueError("h_tensor should be a tensor of Hermitian matrices.")

        self.weight_decay = decay
        self.dtype = dtype
        self.num_h = num_h
        self.n = n
        # initializer()
        self.weight = 0.0 if math.isinf(decay) else 1.0

        # __init__ preprocessing (glue, plain JAX): eigh, offset shift.
        E, V = jnp.linalg.eigh(h_tensor)                  # ascending eigenvalues
        self.offset = E.max(axis=1)                       # (num_h,)
        eye = jnp.eye(n, dtype=dtype)
        h_shifted = h_tensor - self.offset[:, None, None] * eye
        self.h_tensor = h_shifted
        self.shift_origin_offset = (self.offset - E.min(axis=1)).astype(jnp.float32)
        self.X = V[:, :, 0]

        # ---- head-chunk packing (built once; H is constant) -----------------
        lane = _LANE_TARGET
        kc = max(1, -(-lane // n)) if n < lane else 1      # heads per chunk
        num_chunks = max(1, -(-num_h // kc))
        c_real = kc * n
        c_pad = _round_up(max(c_real, lane), 128)          # lane-tile aligned
        self.kc, self.num_chunks = kc, num_chunks
        self.c_real, self.c_pad = c_real, c_pad
        self._needs_bd = (c_pad != n)

        h32 = h_shifted.astype(jnp.float32)
        h_pad = jnp.zeros((num_chunks * kc, n, n), jnp.float32).at[:num_h].set(h32)
        # per-chunk wide slab: hw[chunk, row, i*n + col] = H_{chunk*kc + i}[row, col]
        hw = jnp.transpose(h_pad.reshape(num_chunks, kc, n, n), (0, 2, 1, 3))
        hw = hw.reshape(num_chunks, n, c_real)
        if c_pad > c_real:
            hw = jnp.pad(hw, ((0, 0), (0, 0), (0, c_pad - c_real)))
        # flatten so the grid's lane-blocks are contiguous: (n, num_chunks*c_pad)
        self.h_wide = jnp.transpose(hw, (1, 0, 2)).reshape(n, num_chunks * c_pad)

        self._mel = _build_mel_call(n, kc, c_pad, num_chunks, self._needs_bd)
        # Whole forward (kernel + unpack + eigvalsh + reductions) under one jit;
        # the decaying weight is a traced argument (not baked from self).
        self._loss_jit = jax.jit(self._loss_impl)

    # ---- pure forward (jitted) ---------------------------------------------
    def _loss_impl(self, U, weight):
        n, kc, num_chunks = self.n, self.kc, self.num_chunks
        c_pad, c_real, num_h = self.c_pad, self.c_real, self.num_h

        U = U.astype(jnp.float32)
        stoq_wide, neg = self._mel(U, self.h_wide)

        # Lane-dense slab -> (num_h, n, n); padded heads/lanes are exact zeros
        # and are sliced away before the eigensolve.
        stoq = stoq_wide.reshape(n, num_chunks, c_pad)[:, :, :c_real]
        stoq = jnp.transpose(stoq.reshape(n, num_chunks, kc, n), (1, 2, 0, 3))
        stoq = stoq.reshape(num_chunks * kc, n, n)[:num_h]

        # TODO(synk): dense eigvalsh (ED) has no Pallas equivalent; computed
        # with XLA's eigensolver on the kernel's stoquastic output.
        E = jnp.linalg.eigvalsh(stoq)                       # (num_h, n), ascending

        total_neg = jnp.sum(neg) / float(n) ** 3            # sum_i mean(|A_i-S_i|)/n
        return jnp.abs(
            jnp.sum(-E[:, 0] - self.shift_origin_offset) + weight * total_neg
        )

    def __call__(self, U):
        loss = self._loss_jit(jnp.asarray(U, jnp.float32), jnp.float32(self.weight))
        # weight *= exp(-1/decay)  (stays 0 for decay == inf); host-side as in torch.
        self.weight *= math.exp(-1.0 / self.weight_decay)
        return loss


# ----------------------------------------------------------------------------
# Pure-JAX reference matching the torch forward semantics (for verification).
# ----------------------------------------------------------------------------
def _reference_loss(h_shifted, shift_origin_offset, U, weight):
    A = jnp.einsum("ab,ibc,dc->iad", U, h_shifted, U)
    S = -jnp.abs(A)
    neg = jnp.abs(A - S).mean(axis=(1, 2)) / h_shifted.shape[-1]
    E = jnp.linalg.eigvalsh(S)
    return jnp.abs(jnp.sum(-E[:, 0] + weight * neg - shift_origin_offset))


if __name__ == "__main__":
    root = jax.random.PRNGKey(0)

    def run_case(key, num_h, n, decay):
        k_h, k_u = jax.random.split(key)
        # Deterministic synthetic local Hamiltonians: real symmetric (Hermitian).
        r = jax.random.normal(k_h, (num_h, n, n), dtype=jnp.float32)
        h_tensor = 0.5 * (r + jnp.swapaxes(r, -1, -2))
        # Deterministic orthogonal U (stand-in for the unitary being optimized).
        g = jax.random.normal(k_u, (n, n), dtype=jnp.float32)
        U, _ = jnp.linalg.qr(g)

        mel = MinimumEnergyLossPallas(h_tensor, decay=decay, dtype=jnp.float32)
        w0 = mel.weight                      # weight used by this forward pass
        loss = jax.block_until_ready(mel(U))
        assert loss.shape == () and bool(jnp.isfinite(loss))

        ref = jax.block_until_ready(
            _reference_loss(mel.h_tensor, mel.shift_origin_offset, U, w0))
        err = abs(float(loss) - float(ref))
        assert err <= 5e-3 * (1.0 + abs(float(ref))), (num_h, n, float(loss), float(ref))

    keys = jax.random.split(root, 3)
    # 1 chunk, kc=16 in-kernel blockdiag path (tiny local Hamiltonians).
    run_case(keys[0], num_h=3, n=16, decay=math.inf)
    # 2 parallel chunks (padded heads), finite decay -> negativity term exercised.
    run_case(keys[1], num_h=5, n=64, decay=2.0)
    # Single-head chunk: second contraction directly against U (no blockdiag).
    run_case(keys[2], num_h=1, n=256, decay=4.0)

    print("KERNEL_OK")
</pallas_src>

<mosaic_0001>
module attributes {stable_mosaic.version = 11 : i64} {
  func.func @kernel(%arg0: i32, %arg1: memref<16x16xf32, #tpu.memory_space<vmem>>, %arg2: memref<16x256xf32, #tpu.memory_space<vmem>>, %arg3: memref<16x256xf32, #tpu.memory_space<vmem>>, %arg4: memref<1x1x1xf32, #tpu.memory_space<vmem>>, %arg5: memref<256x256xf32, #tpu.memory_space<vmem>>) attributes {dimension_semantics = [#tpu.dimension_semantics<parallel>], iteration_bounds = array<i64: 1>, scalar_prefetch = 0 : i64, scratch_operands = 1 : i64, tpu.core_type = #tpu.core_type<tc>, window_params = [{pipeline_mode = #tpu.pipeline_mode<synchronous>, transform_indices = @transform_0, window_bounds = array<i64: 16, 16>}, {transform_indices = @transform_1, window_bounds = array<i64: 16, 256>}, {transform_indices = @transform_2, window_bounds = array<i64: 16, 256>}, {transform_indices = @transform_3, window_bounds = array<i64: 1, 1, 1>}]} {
    %c0 = arith.constant 0 : index
    %c0_0 = arith.constant 0 : index
    %0 = vector.load %arg1[%c0, %c0_0] : memref<16x16xf32, #tpu.memory_space<vmem>>, vector<16x16xf32>
    %c0_1 = arith.constant 0 : index
    %c0_2 = arith.constant 0 : index
    %1 = vector.load %arg2[%c0_1, %c0_2] : memref<16x256xf32, #tpu.memory_space<vmem>>, vector<16x256xf32>
    %cst = arith.constant dense<0.000000e+00> : vector<16x256xf32>
    %2 = tpu.matmul %0, %1, %cst {dimension_numbers = #tpu.dot_dimension_numbers<[1], [0], [0], [1], [0, 0, 1, 1], [], []>} : vector<16x16xf32>, vector<16x256xf32>, vector<16x256xf32> -> vector<16x256xf32>
    %cst_3 = arith.constant 0.000000e+00 : f32
    %3 = vector.broadcast %cst_3 : f32 to vector<256x256xf32>
    %c0_4 = arith.constant 0 : index
    %c0_5 = arith.constant 0 : index
    %4 = vector.load %arg5[%c0_4, %c0_5] : memref<256x256xf32, #tpu.memory_space<vmem>>, vector<256x256xf32>
    tpu.vector_store %arg5[%c0_4, %c0_5], %3 {strides = array<i32>} : memref<256x256xf32, #tpu.memory_space<vmem>>, vector<256x256xf32>,
    %c0_6 = arith.constant 0 : index
    %c0_7 = arith.constant 0 : index
    %5 = vector.load %arg5[%c0_6, %c0_7] : memref<256x256xf32, #tpu.memory_space<vmem>>, vector<16x16xf32>
    tpu.vector_store %arg5[%c0_6, %c0_7], %0 {strides = array<i32>} : memref<256x256xf32, #tpu.memory_space<vmem>>, vector<16x16xf32>,
    %c16 = arith.constant 16 : index
    %c16_8 = arith.constant 16 : index
    %6 = vector.load %arg5[%c16, %c16_8] : memref<256x256xf32, #tpu.memory_space<vmem>>, vector<16x16xf32>
    tpu.vector_store %arg5[%c16, %c16_8], %0 {strides = array<i32>} : memref<256x256xf32, #tpu.memory_space<vmem>>, vector<16x16xf32>,
    %c32 = arith.constant 32 : index
    %c32_9 = arith.constant 32 : index
    %7 = vector.load %arg5[%c32, %c32_9] : memref<256x256xf32, #tpu.memory_space<vmem>>, vector<16x16xf32>
    tpu.vector_store %arg5[%c32, %c32_9], %0 {strides = array<i32>} : memref<256x256xf32, #tpu.memory_space<vmem>>, vector<16x16xf32>,
    %c48 = arith.constant 48 : index
    %c48_10 = arith.constant 48 : index
    %8 = vector.load %arg5[%c48, %c48_10] : memref<256x256xf32, #tpu.memory_space<vmem>>, vector<16x16xf32>
    tpu.vector_store %arg5[%c48, %c48_10], %0 {strides = array<i32>} : memref<256x256xf32, #tpu.memory_space<vmem>>, vector<16x16xf32>,
    %c64 = arith.constant 64 : index
    %c64_11 = arith.constant 64 : index
    %9 = vector.load %arg5[%c64, %c64_11] : memref<256x256xf32, #tpu.memory_space<vmem>>, vector<16x16xf32>
    tpu.vector_store %arg5[%c64, %c64_11], %0 {strides = array<i32>} : memref<256x256xf32, #tpu.memory_space<vmem>>, vector<16x16xf32>,
    %c80 = arith.constant 80 : index
    %c80_12 = arith.constant 80 : index
    %10 = vector.load %arg5[%c80, %c80_12] : memref<256x256xf32, #tpu.memory_space<vmem>>, vector<16x16xf32>
    tpu.vector_store %arg5[%c80, %c80_12], %0 {strides = array<i32>} : memref<256x256xf32, #tpu.memory_space<vmem>>, vector<16x16xf32>,
    %c96 = arith.constant 96 : index
    %c96_13 = arith.constant 96 : index
    %11 = vector.load %arg5[%c96, %c96_13] : memref<256x256xf32, #tpu.memory_space<vmem>>, vector<16x16xf32>
    tpu.vector_store %arg5[%c96, %c96_13], %0 {strides = array<i32>} : memref<256x256xf32, #tpu.memory_space<vmem>>, vector<16x16xf32>,
    %c112 = arith.constant 112 : index
    %c112_14 = arith.constant 112 : index
    %12 = vector.load %arg5[%c112, %c112_14] : memref<256x256xf32, #tpu.memory_space<vmem>>, vector<16x16xf32>
    tpu.vector_store %arg5[%c112, %c112_14], %0 {strides = array<i32>} : memref<256x256xf32, #tpu.memory_space<vmem>>, vector<16x16xf32>,
    %c128 = arith.constant 128 : index
    %c128_15 = arith.constant 128 : index
    %13 = vector.load %arg5[%c128, %c128_15] : memref<256x256xf32, #tpu.memory_space<vmem>>, vector<16x16xf32>
    tpu.vector_store %arg5[%c128, %c128_15], %0 {strides = array<i32>} : memref<256x256xf32, #tpu.memory_space<vmem>>, vector<16x16xf32>,
    %c144 = arith.constant 144 : index
    %c144_16 = arith.constant 144 : index
    %14 = vector.load %arg5[%c144, %c144_16] : memref<256x256xf32, #tpu.memory_space<vmem>>, vector<16x16xf32>
    tpu.vector_store %arg5[%c144, %c144_16], %0 {strides = array<i32>} : memref<256x256xf32, #tpu.memory_space<vmem>>, vector<16x16xf32>,
    %c160 = arith.constant 160 : index
    %c160_17 = arith.constant 160 : index
    %15 = vector.load %arg5[%c160, %c160_17] : memref<256x256xf32, #tpu.memory_space<vmem>>, vector<16x16xf32>
    tpu.vector_store %arg5[%c160, %c160_17], %0 {strides = array<i32>} : memref<256x256xf32, #tpu.memory_space<vmem>>, vector<16x16xf32>,
    %c176 = arith.constant 176 : index
    %c176_18 = arith.constant 176 : index
    %16 = vector.load %arg5[%c176, %c176_18] : memref<256x256xf32, #tpu.memory_space<vmem>>, vector<16x16xf32>
    tpu.vector_store %arg5[%c176, %c176_18], %0 {strides = array<i32>} : memref<256x256xf32, #tpu.memory_space<vmem>>, vector<16x16xf32>,
    %c192 = arith.constant 192 : index
    %c192_19 = arith.constant 192 : index
    %17 = vector.load %arg5[%c192, %c192_19] : memref<256x256xf32, #tpu.memory_space<vmem>>, vector<16x16xf32>
    tpu.vector_store %arg5[%c192, %c192_19], %0 {strides = array<i32>} : memref<256x256xf32, #tpu.memory_space<vmem>>, vector<16x16xf32>,
    %c208 = arith.constant 208 : index
    %c208_20 = arith.constant 208 : index
    %18 = vector.load %arg5[%c208, %c208_20] : memref<256x256xf32, #tpu.memory_space<vmem>>, vector<16x16xf32>
    tpu.vector_store %arg5[%c208, %c208_20], %0 {strides = array<i32>} : memref<256x256xf32, #tpu.memory_space<vmem>>, vector<16x16xf32>,
    %c224 = arith.constant 224 : index
    %c224_21 = arith.constant 224 : index
    %19 = vector.load %arg5[%c224, %c224_21] : memref<256x256xf32, #tpu.memory_space<vmem>>, vector<16x16xf32>
    tpu.vector_store %arg5[%c224, %c224_21], %0 {strides = array<i32>} : memref<256x256xf32, #tpu.memory_space<vmem>>, vector<16x16xf32>,
    %c240 = arith.constant 240 : index
    %c240_22 = arith.constant 240 : index
    %20 = vector.load %arg5[%c240, %c240_22] : memref<256x256xf32, #tpu.memory_space<vmem>>, vector<16x16xf32>
    tpu.vector_store %arg5[%c240, %c240_22], %0 {strides = array<i32>} : memref<256x256xf32, #tpu.memory_space<vmem>>, vector<16x16xf32>,
    %c0_23 = arith.constant 0 : index
    %c0_24 = arith.constant 0 : index
    %21 = vector.load %arg5[%c0_23, %c0_24] : memref<256x256xf32, #tpu.memory_space<vmem>>, vector<256x256xf32>
    %cst_25 = arith.constant dense<0.000000e+00> : vector<16x256xf32>
    %22 = tpu.matmul %2, %21, %cst_25 {dimension_numbers = #tpu.dot_dimension_numbers<[1], [1], [0], [0], [0, 0, 1, 0], [], []>} : vector<16x256xf32>, vector<256x256xf32>, vector<16x256xf32> -> vector<16x256xf32>
    %23 = math.absf %22 : vector<16x256xf32>
    %cst_26 = arith.constant 0.000000e+00 : f32
    %24 = vector.broadcast %cst_26 : f32 to vector<16x256xf32>
    %25 = arith.subf %24, %23 : vector<16x256xf32>
    %c0_27 = arith.constant 0 : index
    %c0_28 = arith.constant 0 : index
    %26 = vector.load %arg3[%c0_27, %c0_28] : memref<16x256xf32, #tpu.memory_space<vmem>>, vector<16x256xf32>
    tpu.vector_store %arg3[%c0_27, %c0_28], %25 {strides = array<i32>} : memref<16x256xf32, #tpu.memory_space<vmem>>, vector<16x256xf32>,
    %27 = arith.addf %22, %23 : vector<16x256xf32>
    %28 = vector.shape_cast %27 : vector<16x256xf32> to vector<1x16x256xf32>
    %cst_29 = arith.constant dense<0.000000e+00> : vector<1xf32>
    %29 = vector.multi_reduction <add>, %28, %cst_29 [1, 2] : vector<1x16x256xf32> to vector<1xf32>
    %30 = vector.shape_cast %29 : vector<1xf32> to vector<1x1x1xf32>
    %31 = vector.extract %30[0, 0, 0] : f32 from vector<1x1x1xf32>
    %32 = vector.broadcast %31 : f32 to vector<1x1x1xf32>
    %c0_30 = arith.constant 0 : index
    %c0_31 = arith.constant 0 : index
    %c0_32 = arith.constant 0 : index
    %33 = vector.load %arg4[%c0_30, %c0_31, %c0_32] : memref<1x1x1xf32, #tpu.memory_space<vmem>>, vector<1x1x1xf32>
    tpu.vector_store %arg4[%c0_30, %c0_31, %c0_32], %32 {strides = array<i32>} : memref<1x1x1xf32, #tpu.memory_space<vmem>>, vector<1x1x1xf32>,
    return
  }
  func.func @transform_0(%arg0: i32) -> (i32, i32) {
    %c0_i32 = arith.constant 0 : i32
    %c0_i32_0 = arith.constant 0 : i32
    %c0_i32_1 = arith.constant 0 : i32
    return %c0_i32, %c0_i32_0 : i32, i32
  }
  func.func @transform_1(%arg0: i32) -> (i32, i32) {
    %c0_i32 = arith.constant 0 : i32
    %c0_i32_0 = arith.constant 0 : i32
    return %c0_i32, %arg0 : i32, i32
  }
  func.func @transform_2(%arg0: i32) -> (i32, i32) {
    %c0_i32 = arith.constant 0 : i32
    %c0_i32_0 = arith.constant 0 : i32
    return %c0_i32, %arg0 : i32, i32
  }
  func.func @transform_3(%arg0: i32) -> (i32, i32, i32) {
    %c0_i32 = arith.constant 0 : i32
    %c0_i32_0 = arith.constant 0 : i32
    %c0_i32_1 = arith.constant 0 : i32
    return %arg0, %c0_i32, %c0_i32_0 : i32, i32, i32
  }
}

</mosaic_0001>

<llo_original>
// kernel: custom-call.3
$region0: #{custom-call.3}
  %s0 = inlined_call_operand.vmem [shape: f32[3,8,8], index: 0, kind: input, shape index: {}]
  %s1 = inlined_call_operand.vmem [shape: f32[3,8,8], index: 1, kind: input, shape index: {}]
  %s2 = inlined_call_operand.vmem [shape: f32[3,8,8], index: 2, kind: input, shape index: {}]
  %s3 = inlined_call_operand.vmem [shape: f32[3,8,8], index: 3, kind: input, shape index: {}]
  %s4 = inlined_call_operand.vmem [shape: f32[3,8], index: 4, kind: output, shape index: {0}]
  %s5 = inlined_call_operand.vmem [shape: f32[3,8], index: 5, kind: output, shape index: {1}]
  %s6 = inlined_call_operand.hbm [shape: f32[3,8,8], index: 6, kind: output, shape index: {2}]
  %s7 = inlined_call_operand.hbm [shape: f32[3,8,8], index: 7, kind: output, shape index: {3}]
  %s8 = inlined_call_operand.hbm [shape: f32[3,8,8], index: 8, kind: output, shape index: {4}]
  %s9 = inlined_call_operand.hbm [shape: f32[3,8,8], index: 9, kind: output, shape index: {5}]
  %10 = xla_tuple %s4, %s5, %s6, %s7, %s8, %s9
  $region1: #{custom-call.3} parent=0
    #allocation0 [shape = 'u8[8192]{0}', space=vmem, size = 0x2000, scoped, tag = 'operand span for operand 0']
    #allocation1 [shape = 'u8[8192]{0}', space=vmem, size = 0x2000, scoped, tag = 'operand span for operand 1']
    #allocation2 [shape = 'u8[8192]{0}', space=vmem, size = 0x2000, scoped, tag = 'operand span for operand 2']
    #allocation3 [shape = 'u8[8192]{0}', space=vmem, size = 0x2000, scoped, tag = 'operand span for operand 3']
    #allocation4 [shape = 'u8[4096]{0}', space=vmem, size = 0x1000, scoped, tag = 'operand span for operand 4']
    #allocation5 [shape = 'u8[4096]{0}', space=vmem, size = 0x1000, scoped, tag = 'packed  for operand 4']
    #allocation6 [shape = 'u8[4096]{0}', space=vmem, size = 0x1000, scoped, tag = 'operand span for operand 5']
    #allocation7 [shape = 'u8[4096]{0}', space=vmem, size = 0x1000, scoped, tag = 'packed  for operand 5']
    #allocation8 [shape = 'u8[8192]{0}', space=vmem, size = 0x2000, scoped, tag = 'operand span for operand 6']
    #allocation9 [shape = 's32[2]{0}', space=sflag, size = 0x8, scoped, tag = 'scoped memory for custom-call.3']
    #allocation10 [shape = 'u8[8192]{0}', space=vmem, size = 0x2000, scoped, tag = 'operand span for operand 7']
    #allocation11 [shape = 's32[2]{0}', space=sflag, size = 0x8, scoped, tag = 'scoped memory for custom-call.3']
    #allocation12 [shape = 'u8[8192]{0}', space=vmem, size = 0x2000, scoped, tag = 'operand span for operand 8']
    #allocation13 [shape = 'u8[8192]{0}', space=vmem, size = 0x2000, scoped, tag = 'operand span for operand 9']
    #allocation14 [shape = 's32[2]{0}', space=sflag, size = 0x8, scoped, tag = 'scoped memory for custom-call.3']
    %11 = vsyncpa [#allocation9], 0
    %s12 = scalar_lea.sflag [#allocation9], 1
    %13 = vsyncpa %s12, 0
    %14 = vsyncpa [#allocation11], 0
    %s15 = scalar_lea.sflag [#allocation11], 1
    %16 = vsyncpa %s15, 0
    %17 = vsyncpa [#allocation14], 0
    %s18 = scalar_lea.sflag [#allocation14], 1
    %19 = vsyncpa %s18, 0
    loop: start=0, step=1, limit=5
    $region2: #{custom-call.3} parent=1 // loop_pre_header
      _
    $region3: #{custom-call.3} parent=1 // loop_header
      %s21 = sphi 0, %s25
      %p22 = scmp.ge.s32.totalorder %s21, 5
      %s33 = sphi 0, %s35
      %s36 = sphi 0, %s33
      %s37 = sphi 0, %s36
      %s53 = sphi 0, %s37
      %s61 = sphi 0, %s63
      %s64 = sphi 0, %s61
      %s65 = sphi 0, %s64
      %s81 = sphi 0, %s65
    $region4: #{custom-call.3} parent=1 // loop_header_branch
      %24 = sbr.rel (%p22) target = $region8
    $region5: #{custom-call.3} parent=1 // loop_body
      %s26 = ssub.s32 %s21, 1
      %s27 = ssub.s32 %s21, 2
      %s28 = sadd.s32 %s21, 1
      %s29 = sshrl.u32 %s21, 3
      %s30 = sshrl.u32 %s28, 3
      %s31 = ssub.s32 %s29, %s30
      %p32 = scmp.eq.s32.totalorder %s31, 0
      %s34 = sadd.s32 %s33, 1
      %s35 = scalar_select %p32, %s33, %s34
      %p38 = pneg %p32
      %p39 = scmp.eq.s32.totalorder %s21, 2
      %p40 = por %p38, %p39
      %p41 = scmp.ne.s32.totalorder %s33, %s36
      %p42 = scmp.eq.s32.totalorder %s21, 0
      %p43 = por %p41, %p42
      %p44 = scmp.ne.s32.totalorder %s33, %s36
      %p45 = scmp.eq.s32.totalorder %s26, 2
      %p46 = por %p44, %p45
      %p47 = scmp.ne.s32.totalorder %s36, %s37
      %p48 = scmp.eq.s32.totalorder %s26, 0
      %p49 = por %p47, %p48
      %p50 = scmp.ne.s32.totalorder %s36, %s37
      %p51 = scmp.eq.s32.totalorder %s27, 2
      %p52 = por %p50, %p51
      %p54 = scmp.ne.s32.totalorder %s37, %s53
      %p55 = scmp.eq.s32.totalorder %s27, 0
      %p56 = por %p54, %p55
      %s57 = sshrl.u32 %s21, 3
      %s58 = sshrl.u32 %s28, 3
      %s59 = ssub.s32 %s57, %s58
      %p60 = scmp.eq.s32.totalorder %s59, 0
      %s62 = sadd.s32 %s61, 1
      %s63 = scalar_select %p60, %s61, %s62
      %p66 = pneg %p60
      %p67 = scmp.eq.s32.totalorder %s21, 2
      %p68 = por %p66, %p67
      %p69 = scmp.ne.s32.totalorder %s61, %s64
      %p70 = scmp.eq.s32.totalorder %s21, 0
      %p71 = por %p69, %p70
      %p72 = scmp.ne.s32.totalorder %s61, %s64
      %p73 = scmp.eq.s32.totalorder %s26, 2
      %p74 = por %p72, %p73
      %p75 = scmp.ne.s32.totalorder %s64, %s65
      %p76 = scmp.eq.s32.totalorder %s26, 0
      %p77 = por %p75, %p76
      %p78 = scmp.ne.s32.totalorder %s64, %s65
      %p79 = scmp.eq.s32.totalorder %s27, 2
      %p80 = por %p78, %p79
      %p82 = scmp.ne.s32.totalorder %s65, %s81
      %p83 = scmp.eq.s32.totalorder %s27, 0
      %p84 = por %p82, %p83
      %p85 = scmp.le.s32.totalorder 1, %s21
      %p86 = scmp.lt.s32.totalorder %s21, 4
      %p87 = pnand %p85, %p86
      %p88 = pneg %p87
      // Predicated region
      $region9: #{custom-call.3} parent=5 // pred_check
        _
      $region10: #{custom-call.3} parent=5 // pred_check_branch
        %90 = sbr.rel (%p87) target = $region12
      $region11: #{custom-call.3} parent=5 // pred_region
        %s91 = ssub.s32 %s21, 1
      $region12: #{custom-call.3} parent=5 // pred_fallthru
        _
      %p92 = scmp.lt.s32.totalorder %s21, 3
      // Predicated region
      $region13: #{custom-call.3} parent=5 // pred_check
        %p93 = pneg %p92
      $region14: #{custom-call.3} parent=5 // pred_check_branch
        %95 = sbr.rel (%p93) target = $region16
      $region15: #{custom-call.3} parent=5 // pred_region
        %s96 = sand.u32 %s21, 1
        %s97 = sand.u32 %s21, 1
        %s98 = smul.addr %s97, 8
        %s99 = scalar_lea.vmem [#allocation0], %s98
        %s100 = smul.addr %s21, 8
        %s101 = scalar_lea.vmem %s0, %s100
        // Predicated region
        $region17: #{custom-call.3} parent=15 // pred_check
          _
        $region18: #{custom-call.3} parent=15 // pred_check_branch
          %103 = sbr.rel (0) target = $region20
        $region19: #{custom-call.3} parent=15 // pred_region
          // Predicated region
          $region21: #{custom-call.3} parent=19 // pred_check
            _
          $region22: #{custom-call.3} parent=19 // pred_check_branch
            %105 = sbr.rel (0) target = $region24
          $region23: #{custom-call.3} parent=19 // pred_region
            // Predicated region
            $region36: #{custom-call.3} parent=23 // pred_check
              _
            $region37: #{custom-call.3} parent=23 // pred_check_branch
              %121 = sbr.rel (0) target = $region39
            $region38: #{custom-call.3} parent=23 // pred_region
              loop: start=0, step=1, limit=1
              $region40: #{custom-call.3} parent=38 // loop_pre_header
                _
              $region41: #{custom-call.3} parent=38 // loop_header
                %s123 = sphi 0, %s127
                %p124 = scmp.ge.s32.totalorder %s123, 1
                %s128 = sphi %s101, %s101
                %s129 = sphi %s99, %s99
              $region42: #{custom-call.3} parent=38 // loop_header_branch
                %126 = sbr.rel (%p124) target = $region46
              $region43: #{custom-call.3} parent=38 // loop_body
                %v130 = vld [vmem:[%s128] sm:$0xff]
                %131 = vst [vmem:[%s129] sm:$0xff] %v130
              $region44: #{custom-call.3} parent=38 // loop_footer
                %s127 = sadd.s32 1, %s123
              $region45: #{custom-call.3} parent=38 // loop_footer_branch
                %122 = sbr.rel target = $region41
              $region46: #{custom-call.3} parent=38 // loop_exit
                _
            $region39: #{custom-call.3} parent=23 // pred_fallthru
              _
            // Predicated region
            $region47: #{custom-call.3} parent=23 // pred_check
              _
            $region48: #{custom-call.3} parent=23 // pred_check_branch
              %133 = sbr.rel target = $region50
            $region49: #{custom-call.3} parent=23 // pred_region
              _
            $region50: #{custom-call.3} parent=23 // pred_fallthru
              _
          $region24: #{custom-call.3} parent=19 // pred_fallthru
            _
          // Predicated region
          $region25: #{custom-call.3} parent=19 // pred_check
            _
          $region26: #{custom-call.3} parent=19 // pred_check_branch
            %107 = sbr.rel target = $region28
          $region27: #{custom-call.3} parent=19 // pred_region
            %s109 = ssub.s32 256, 1
            loop: start=0, step=1, limit=1
            $region29: #{custom-call.3} parent=27 // loop_pre_header
              _
            $region30: #{custom-call.3} parent=27 // loop_header
              %s111 = sphi 0, %s115
              %p112 = scmp.ge.s32.totalorder %s111, 1
              %s116 = sphi %s101, %s101
              %s117 = sphi %s99, %s99
            $region31: #{custom-call.3} parent=27 // loop_header_branch
              %114 = sbr.rel (%p112) target = $region35
            $region32: #{custom-call.3} parent=27 // loop_body
              %v118 = vld [vmem:[%s116] sm:%s109]
              %119 = vst [vmem:[%s117] sm:%s109] %v118
            $region33: #{custom-call.3} parent=27 // loop_footer
              %s115 = sadd.s32 1, %s111
            $region34: #{custom-call.3} parent=27 // loop_footer_branch
              %110 = sbr.rel target = $region30
            $region35: #{custom-call.3} parent=27 // loop_exit
              _
          $region28: #{custom-call.3} parent=19 // pred_fallthru
            _
        $region20: #{custom-call.3} parent=15 // pred_fallthru
          _
        %134 = vnop
        %s135 = sand.u32 %s21, 1
        %s136 = sand.u32 %s21, 1
        %s137 = smul.addr %s136, 8
        %s138 = scalar_lea.vmem [#allocation1], %s137
        %s139 = smul.addr %s21, 8
        %s140 = scalar_lea.vmem %s1, %s139
        // Predicated region
        $region51: #{custom-call.3} parent=15 // pred_check
          _
        $region52: #{custom-call.3} parent=15 // pred_check_branch
          %142 = sbr.rel (0) target = $region54
        $region53: #{custom-call.3} parent=15 // pred_region
          // Predicated region
          $region55: #{custom-call.3} parent=53 // pred_check
            _
          $region56: #{custom-call.3} parent=53 // pred_check_branch
            %144 = sbr.rel (0) target = $region58
          $region57: #{custom-call.3} parent=53 // pred_region
            // Predicated region
            $region70: #{custom-call.3} parent=57 // pred_check
              _
            $region71: #{custom-call.3} parent=57 // pred_check_branch
              %160 = sbr.rel (0) target = $region73
            $region72: #{custom-call.3} parent=57 // pred_region
              loop: start=0, step=1, limit=1
              $region74: #{custom-call.3} parent=72 // loop_pre_header
                _
              $region75: #{custom-call.3} parent=72 // loop_header
                %s162 = sphi 0, %s166
                %p163 = scmp.ge.s32.totalorder %s162, 1
                %s167 = sphi %s140, %s140
                %s168 = sphi %s138, %s138
              $region76: #{custom-call.3} parent=72 // loop_header_branch
                %165 = sbr.rel (%p163) target = $region80
              $region77: #{custom-call.3} parent=72 // loop_body
                %v169 = vld [vmem:[%s167] sm:$0xff]
                %170 = vst [vmem:[%s168] sm:$0xff] %v169
              $region78: #{custom-call.3} parent=72 // loop_footer
                %s166 = sadd.s32 1, %s162
              $region79: #{custom-call.3} parent=72 // loop_footer_branch
                %161 = sbr.rel target = $region75
              $region80: #{custom-call.3} parent=72 // loop_exit
                _
            $region73: #{custom-call.3} parent=57 // pred_fallthru
              _
            // Predicated region
            $region81: #{custom-call.3} parent=57 // pred_check
              _
            $region82: #{custom-call.3} parent=57 // pred_check_branch
              %172 = sbr.rel target = $region84
            $region83: #{custom-call.3} parent=57 // pred_region
              _
            $region84: #{custom-call.3} parent=57 // pred_fallthru
              _
          $region58: #{custom-call.3} parent=53 // pred_fallthru
            _
          // Predicated region
          $region59: #{custom-call.3} parent=53 // pred_check
            _
          $region60: #{custom-call.3} parent=53 // pred_check_branch
            %146 = sbr.rel target = $region62
          $region61: #{custom-call.3} parent=53 // pred_region
            %s148 = ssub.s32 256, 1
            loop: start=0, step=1, limit=1
            $region63: #{custom-call.3} parent=61 // loop_pre_header
              _
            $region64: #{custom-call.3} parent=61 // loop_header
              %s150 = sphi 0, %s154
              %p151 = scmp.ge.s32.totalorder %s150, 1
              %s155 = sphi %s140, %s140
              %s156 = sphi %s138, %s138
            $region65: #{custom-call.3} parent=61 // loop_header_branch
              %153 = sbr.rel (%p151) target = $region69
            $region66: #{custom-call.3} parent=61 // loop_body
              %v157 = vld [vmem:[%s155] sm:%s148]
              %158 = vst [vmem:[%s156] sm:%s148] %v157
            $region67: #{custom-call.3} parent=61 // loop_footer
              %s154 = sadd.s32 1, %s150
            $region68: #{custom-call.3} parent=61 // loop_footer_branch
              %149 = sbr.rel target = $region64
            $region69: #{custom-call.3} parent=61 // loop_exit
              _
          $region62: #{custom-call.3} parent=53 // pred_fallthru
            _
        $region54: #{custom-call.3} parent=15 // pred_fallthru
          _
        %173 = vnop
        %s174 = sand.u32 %s21, 1
        %s175 = sand.u32 %s21, 1
        %s176 = smul.addr %s175, 8
        %s177 = scalar_lea.vmem [#allocation2], %s176
        %s178 = smul.addr %s21, 8
        %s179 = scalar_lea.vmem %s2, %s178
        // Predicated region
        $region85: #{custom-call.3} parent=15 // pred_check
          _
        $region86: #{custom-call.3} parent=15 // pred_check_branch
          %181 = sbr.rel (0) target = $region88
        $region87: #{custom-call.3} parent=15 // pred_region
          // Predicated region
          $region89: #{custom-call.3} parent=87 // pred_check
            _
          $region90: #{custom-call.3} parent=87 // pred_check_branch
            %183 = sbr.rel (0) target = $region92
          $region91: #{custom-call.3} parent=87 // pred_region
            // Predicated region
            $region104: #{custom-call.3} parent=91 // pred_check
              _
            $region105: #{custom-call.3} parent=91 // pred_check_branch
              %199 = sbr.rel (0) target = $region107
            $region106: #{custom-call.3} parent=91 // pred_region
              loop: start=0, step=1, limit=1
              $region108: #{custom-call.3} parent=106 // loop_pre_header
                _
              $region109: #{custom-call.3} parent=106 // loop_header
                %s201 = sphi 0, %s205
                %p202 = scmp.ge.s32.totalorder %s201, 1
                %s206 = sphi %s179, %s179
                %s207 = sphi %s177, %s177
              $region110: #{custom-call.3} parent=106 // loop_header_branch
                %204 = sbr.rel (%p202) target = $region114
              $region111: #{custom-call.3} parent=106 // loop_body
                %v208 = vld [vmem:[%s206] sm:$0xff]
                %209 = vst [vmem:[%s207] sm:$0xff] %v208
              $region112: #{custom-call.3} parent=106 // loop_footer
                %s205 = sadd.s32 1, %s201
              $region113: #{custom-call.3} parent=106 // loop_footer_branch
                %200 = sbr.rel target = $region109
              $region114: #{custom-call.3} parent=106 // loop_exit
                _
            $region107: #{custom-call.3} parent=91 // pred_fallthru
              _
            // Predicated region
            $region115: #{custom-call.3} parent=91 // pred_check
              _
            $region116: #{custom-call.3} parent=91 // pred_check_branch
              %211 = sbr.rel target = $region118
            $region117: #{custom-call.3} parent=91 // pred_region
              _
            $region118: #{custom-call.3} parent=91 // pred_fallthru
              _
          $region92: #{custom-call.3} parent=87 // pred_fallthru
            _
          // Predicated region
          $region93: #{custom-call.3} parent=87 // pred_check
            _
          $region94: #{custom-call.3} parent=87 // pred_check_branch
            %185 = sbr.rel target = $region96
          $region95: #{custom-call.3} parent=87 // pred_region
            %s187 = ssub.s32 256, 1
            loop: start=0, step=1, limit=1
            $region97: #{custom-call.3} parent=95 // loop_pre_header
              _
            $region98: #{custom-call.3} parent=95 // loop_header
              %s189 = sphi 0, %s193
              %p190 = scmp.ge.s32.totalorder %s189, 1
              %s194 = sphi %s179, %s179
              %s195 = sphi %s177, %s177
            $region99: #{custom-call.3} parent=95 // loop_header_branch
              %192 = sbr.rel (%p190) target = $region103
            $region100: #{custom-call.3} parent=95 // loop_body
              %v196 = vld [vmem:[%s194] sm:%s187]
              %197 = vst [vmem:[%s195] sm:%s187] %v196
            $region101: #{custom-call.3} parent=95 // loop_footer
              %s193 = sadd.s32 1, %s189
            $region102: #{custom-call.3} parent=95 // loop_footer_branch
              %188 = sbr.rel target = $region98
            $region103: #{custom-call.3} parent=95 // loop_exit
              _
          $region96: #{custom-call.3} parent=87 // pred_fallthru
            _
        $region88: #{custom-call.3} parent=15 // pred_fallthru
          _
        %212 = vnop
        %s213 = sand.u32 %s21, 1
        %s214 = sand.u32 %s21, 1
        %s215 = smul.addr %s214, 8
        %s216 = scalar_lea.vmem [#allocation3], %s215
        %s217 = smul.addr %s21, 8
        %s218 = scalar_lea.vmem %s3, %s217
        // Predicated region
        $region119: #{custom-call.3} parent=15 // pred_check
          _
        $region120: #{custom-call.3} parent=15 // pred_check_branch
          %220 = sbr.rel (0) target = $region122
        $region121: #{custom-call.3} parent=15 // pred_region
          // Predicated region
          $region123: #{custom-call.3} parent=121 // pred_check
            _
          $region124: #{custom-call.3} parent=121 // pred_check_branch
            %222 = sbr.rel (0) target = $region126
          $region125: #{custom-call.3} parent=121 // pred_region
            // Predicated region
            $region138: #{custom-call.3} parent=125 // pred_check
              _
            $region139: #{custom-call.3} parent=125 // pred_check_branch
              %238 = sbr.rel (0) target = $region141
            $region140: #{custom-call.3} parent=125 // pred_region
              loop: start=0, step=1, limit=1
              $region142: #{custom-call.3} parent=140 // loop_pre_header
                _
              $region143: #{custom-call.3} parent=140 // loop_header
                %s240 = sphi 0, %s244
                %p241 = scmp.ge.s32.totalorder %s240, 1
                %s245 = sphi %s218, %s218
                %s246 = sphi %s216, %s216
              $region144: #{custom-call.3} parent=140 // loop_header_branch
                %243 = sbr.rel (%p241) target = $region148
              $region145: #{custom-call.3} parent=140 // loop_body
                %v247 = vld [vmem:[%s245] sm:$0xff]
                %248 = vst [vmem:[%s246] sm:$0xff] %v247
              $region146: #{custom-call.3} parent=140 // loop_footer
                %s244 = sadd.s32 1, %s240
              $region147: #{custom-call.3} parent=140 // loop_footer_branch
                %239 = sbr.rel target = $region143
              $region148: #{custom-call.3} parent=140 // loop_exit
                _
            $region141: #{custom-call.3} parent=125 // pred_fallthru
              _
            // Predicated region
            $region149: #{custom-call.3} parent=125 // pred_check
              _
            $region150: #{custom-call.3} parent=125 // pred_check_branch
              %250 = sbr.rel target = $region152
            $region151: #{custom-call.3} parent=125 // pred_region
              _
            $region152: #{custom-call.3} parent=125 // pred_fallthru
              _
          $region126: #{custom-call.3} parent=121 // pred_fallthru
            _
          // Predicated region
          $region127: #{custom-call.3} parent=121 // pred_check
            _
          $region128: #{custom-call.3} parent=121 // pred_check_branch
            %224 = sbr.rel target = $region130
          $region129: #{custom-call.3} parent=121 // pred_region
            %s226 = ssub.s32 256, 1
            loop: start=0, step=1, limit=1
            $region131: #{custom-call.3} parent=129 // loop_pre_header
              _
            $region132: #{custom-call.3} parent=129 // loop_header
              %s228 = sphi 0, %s232
              %p229 = scmp.ge.s32.totalorder %s228, 1
              %s233 = sphi %s218, %s218
              %s234 = sphi %s216, %s216
            $region133: #{custom-call.3} parent=129 // loop_header_branch
              %231 = sbr.rel (%p229) target = $region137
            $region134: #{custom-call.3} parent=129 // loop_body
              %v235 = vld [vmem:[%s233] sm:%s226]
              %236 = vst [vmem:[%s234] sm:%s226] %v235
            $region135: #{custom-call.3} parent=129 // loop_footer
              %s232 = sadd.s32 1, %s228
            $region136: #{custom-call.3} parent=129 // loop_footer_branch
              %227 = sbr.rel target = $region132
            $region137: #{custom-call.3} parent=129 // loop_exit
              _
          $region130: #{custom-call.3} parent=121 // pred_fallthru
            _
        $region122: #{custom-call.3} parent=15 // pred_fallthru
          _
        %251 = vnop
      $region16: #{custom-call.3} parent=5 // pred_fallthru
        _
      %p252 = scmp.le.s32.totalorder 1, %s21
      %p253 = scmp.lt.s32.totalorder %s21, 4
      %p254 = pnand %p252, %p253
      %p255 = pneg %p254
      // Predicated region
      $region153: #{custom-call.3} parent=5 // pred_check
        _
      $region154: #{custom-call.3} parent=5 // pred_check_branch
        %257 = sbr.rel (%p254) target = $region156
      $region155: #{custom-call.3} parent=5 // pred_region
        #allocation15 [shape = 'f32[8,8]{1,0}', space=vmem, size = 0x1000, scoped, tag = 'a top-left matrix']
        #allocation16 [shape = 'f32[8,8]{1,0}', space=vmem, size = 0x1000, scoped, tag = 'a top-right matrix']
        #allocation17 [shape = 'f32[8,8]{1,0}', space=vmem, size = 0x1000, scoped, tag = 'a bottom-left matrix']
        #allocation18 [shape = 'f32[8,8]{1,0}', space=vmem, size = 0x1000, scoped, tag = 'a bottom-right matrix']
        %s258 = ssub.s32 %s21, 1
        %s259 = sand.u32 %s26, 1
        %s260 = sand.u32 %s26, 1
        %s261 = smul.addr %s260, 8
        %s262 = scalar_lea.vmem [#allocation0], %s261
        %s263 = sand.u32 %s26, 1
        %s264 = sand.u32 %s26, 1
        %s265 = smul.addr %s264, 8
        %s266 = scalar_lea.vmem [#allocation1], %s265
        %s267 = sand.u32 %s26, 1
        %s268 = sand.u32 %s26, 1
        %s269 = smul.addr %s268, 8
        %s270 = scalar_lea.vmem [#allocation2], %s269
        %s271 = sand.u32 %s26, 1
        %s272 = sand.u32 %s26, 1
        %s273 = smul.addr %s272, 8
        %s274 = scalar_lea.vmem [#allocation3], %s273
        %s275 = sand.u32 %s26, 1
        %s276 = sand.u32 %s26, 1
        %s277 = smul.addr %s276, 8
        %s278 = scalar_lea.vmem [#allocation0], %s277
        %s279 = sand.u32 %s26, 1
        %s280 = sand.u32 %s26, 1
        %s281 = smul.addr %s280, 8
        %s282 = scalar_lea.vmem [#allocation1], %s281
        %s283 = sand.u32 %s26, 1
        %s284 = sand.u32 %s26, 1
        %s285 = smul.addr %s284, 8
        %s286 = scalar_lea.vmem [#allocation2], %s285
        %s287 = sand.u32 %s26, 1
        %s288 = sand.u32 %s26, 1
        %s289 = smul.addr %s288, 8
        %s290 = scalar_lea.vmem [#allocation3], %s289
        %p291 = pneg %p49
        %p292 = pneg %p46
        %s293 = sand.u32 %s36, 1
        %s294 = sand.u32 %s36, 1
        %s295 = smul.addr %s294, 4
        %s296 = scalar_lea.vmem [#allocation5], %s295
        %p297 = pneg %p77
        %p298 = pneg %p74
        %s299 = sand.u32 %s64, 1
        %s300 = sand.u32 %s64, 1
        %s301 = smul.addr %s300, 4
        %s302 = scalar_lea.vmem [#allocation7], %s301
        %s303 = sand.u32 %s26, 1
        %s304 = scalar_lea.sflag [#allocation9], %s303
        %s305 = sand.u32 %s26, 1
        %s306 = smul.addr %s305, 8
        %s307 = scalar_lea.vmem [#allocation8], %s306
        %s308 = sand.u32 %s26, 1
        %s309 = scalar_lea.sflag [#allocation11], %s308
        %s310 = sand.u32 %s26, 1
        %s311 = smul.addr %s310, 8
        %s312 = scalar_lea.vmem [#allocation10], %s311
        %s313 = sand.u32 %s26, 1
        %s314 = scalar_lea.sflag [#allocation11], %s313
        %s315 = sand.u32 %s26, 1
        %s316 = smul.addr %s315, 8
        %s317 = scalar_lea.vmem [#allocation12], %s316
        %s318 = sand.u32 %s26, 1
        %s319 = scalar_lea.sflag [#allocation14], %s318
        %s320 = sand.u32 %s26, 1
        %s321 = smul.addr %s320, 8
        %s322 = scalar_lea.vmem [#allocation13], %s321
        %s323 = sshrl.u32 %s26, 3
        %s324 = sshrl.u32 %s26, 3
        %s325 = smov [#allocation15]
        %v326 = vld [vmem:[%s262] sm:$0xff]
        %327 = vst [vmem:[%s325] sm:$0xff] %v326
        %s328 = smov [#allocation16]
        %v329 = vld [vmem:[%s266] sm:$0xff]
        %330 = vst [vmem:[%s328] sm:$0xff] %v329
        %s331 = smov [#allocation17]
        %v332 = vld [vmem:[%s270] sm:$0xff]
        %333 = vst [vmem:[%s331] sm:$0xff] %v332
        %s334 = smov [#allocation18]
        %v335 = vld [vmem:[%s274] sm:$0xff]
        %336 = vst [vmem:[%s334] sm:$0xff] %v335
        %337 = vst [vmem:[%s307] sm:$0xff] 0.0
        %338 = vst [vmem:[%s312] sm:$0xff] 0.0
        %339 = vst [vmem:[%s317] sm:$0xff] 0.0
        %340 = vst [vmem:[%s322] sm:$0xff] 0.0
        %s341 = smov %s307
        %v342 = vlaneseq
        %v343 = vand.u32 %v342, 127
        %v344 = vmov %v343
        %v345 = vlaneseq
        %v346 = vshrl.u32 %v345, 7
        %v347 = vmov %v346
        %v348 = vld [vmem:[%s341] sm:$0xff]
        %vm351 = vcmp.eq.s32.totalorder %v347, %v344
        %v352 = vsel %vm351, 1.0, %v348
        %353 = vst [vmem:[%s341] sm:$0xff] %v352
        %s354 = smov %s322
        %v355 = vlaneseq
        %v356 = vand.u32 %v355, 127
        %v357 = vmov %v356
        %v358 = vlaneseq
        %v359 = vshrl.u32 %v358, 7
        %v360 = vmov %v359
        %v361 = vld [vmem:[%s354] sm:$0xff]
        %vm364 = vcmp.eq.s32.totalorder %v360, %v357
        %v365 = vsel %vm364, 1.0, %v361
        %366 = vst [vmem:[%s354] sm:$0xff] %v365
        // While loop
        $region157: #{custom-call.3} parent=155 // loop_pre_header
          _
        $region158: #{custom-call.3} parent=155 // loop_header
          %s368 = sphi 0, %s910
          %v369 = vlaneseq
          %v370 = vand.u32 %v369, 127
          %v371 = vmov %v370
          %v372 = vlaneseq
          %v373 = vshrl.u32 %v372, 7
          %v374 = vmov %v373
          %s375 = smov [#allocation15]
          %v376 = vlaneseq
          %v377 = vand.u32 %v376, 127
          %vm378 = vcmp.ge.s32.totalorder %v377, 0
          %vm379 = vcmp.lt.s32.totalorder %v377, 8
          %vm380 = vmand %vm378, %vm379
          %v381 = vld [vmem:[%s375] sm:$0xff]
          %v382 = vsel %vm380, %v381, 0.0
          %v383 = vmul.f32 %v382, %v382
          %vm386 = vcmp.eq.s32.totalorder %v374, %v371
          %v387 = vsel %vm386, 0.0, %v383
          %v388 = vlaneseq
          %v389 = vand.u32 %v388, 127
          %v390 = vmov %v389
          %v391 = vlaneseq
          %v392 = vshrl.u32 %v391, 7
          %v393 = vmov %v392
          %s394 = smov [#allocation16]
          %v395 = vlaneseq
          %v396 = vand.u32 %v395, 127
          %vm397 = vcmp.ge.s32.totalorder %v396, 0
          %vm398 = vcmp.lt.s32.totalorder %v396, 8
          %vm399 = vmand %vm397, %vm398
          %v400 = vld [vmem:[%s394] sm:$0xff]
          %v401 = vsel %vm399, %v400, 0.0
          %v402 = vmul.f32 %v401, %v401
          %v403 = vadd.f32 %v387, %v402
          %v404 = vadd.f32 %v383, %v402
          %v405 = vlaneseq
          %v406 = vand.u32 %v405, 127
          %v407 = vmov %v406
          %v408 = vlaneseq
          %v409 = vshrl.u32 %v408, 7
          %v410 = vmov %v409
          %s411 = smov [#allocation17]
          %v412 = vlaneseq
          %v413 = vand.u32 %v412, 127
          %vm414 = vcmp.ge.s32.totalorder %v413, 0
          %vm415 = vcmp.lt.s32.totalorder %v413, 8
          %vm416 = vmand %vm414, %vm415
          %v417 = vld [vmem:[%s411] sm:$0xff]
          %v418 = vsel %vm416, %v417, 0.0
          %v419 = vmul.f32 %v418, %v418
          %v420 = vadd.f32 %v403, %v419
          %v421 = vadd.f32 %v404, %v419
          %v422 = vlaneseq
          %v423 = vand.u32 %v422, 127
          %v424 = vmov %v423
          %v425 = vlaneseq
          %v426 = vshrl.u32 %v425, 7
          %v427 = vmov %v426
          %s428 = smov [#allocation18]
          %v429 = vlaneseq
          %v430 = vand.u32 %v429, 127
          %vm431 = vcmp.ge.s32.totalorder %v430, 0
          %vm432 = vcmp.lt.s32.totalorder %v430, 8
          %vm433 = vmand %vm431, %vm432
          %v434 = vld [vmem:[%s428] sm:$0xff]
          %v435 = vsel %vm433, %v434, 0.0
          %v436 = vmul.f32 %v435, %v435
          %vm439 = vcmp.eq.s32.totalorder %v427, %v424
          %v440 = vsel %vm439, 0.0, %v436
          %v441 = vadd.f32 %v420, %v440
          %v442 = vadd.f32 %v421, %v436
          %443 = vadd.xlane.f32.xlu0 %v442
          %v444 = vpop.xlane.xlu0 %443
          %v445 = vrot.slane %v444, 4
          %v446 = vadd.f32 %v444, %v445
          %v447 = vrot.slane %v446, 2
          %v448 = vadd.f32 %v446, %v447
          %v449 = vrot.slane %v448, 1
          %v450 = vadd.f32 %v448, %v449
          %451 = vadd.xlane.f32.xlu0 %v441
          %v452 = vpop.xlane.xlu0 %451
          %v453 = vrot.slane %v452, 4
          %v454 = vadd.f32 %v452, %v453
          %v455 = vrot.slane %v454, 2
          %v456 = vadd.f32 %v454, %v455
          %v457 = vrot.slane %v456, 1
          %v458 = vadd.f32 %v456, %v457
          %s459 = vtos %v458
          %s460 = vtos %v450
          %s461 = smul.f32 1e-10, %s460
          %p462 = scmp.le.f32.partialorder %s459, %s461
          %p463 = scmp.ge.s32.totalorder %s368, 15
          %p464 = por %p462, %p463
        $region159: #{custom-call.3} parent=155 // loop_header_branch
          %912 = sbr.rel (%p464) target = $region163
        $region160: #{custom-call.3} parent=155 // loop_body
          loop: start=0, step=1, limit=15
          $region164: #{custom-call.3} parent=160 // loop_pre_header
            _
          $region165: #{custom-call.3} parent=160 // loop_header
            %s466 = sphi 0, %s470
            %p467 = scmp.ge.s32.totalorder %s466, 15
          $region166: #{custom-call.3} parent=160 // loop_header_branch
            %469 = sbr.rel (%p467) target = $region170
          $region167: #{custom-call.3} parent=160 // loop_body
            #allocation19 [shape = 'f32[1024]{0}', space=vmem, size = 0x1000, scoped, tag = 'a_tl_diag vmem']
            #allocation20 [shape = 'f32[1024]{0}', space=vmem, size = 0x1000, scoped, tag = 'a_tr_diag vmem']
            #allocation21 [shape = 'f32[1024]{0}', space=vmem, size = 0x1000, scoped, tag = 'a_br_diag vmem']
            #allocation22 [shape = 'f32[1024]{0}', space=vmem, size = 0x1000, scoped, tag = 'rt1 vmem']
            #allocation23 [shape = 'f32[1024]{0}', space=vmem, size = 0x1000, scoped, tag = 'rt2 vmem']
            #allocation24 [shape = 'f32[1024]{0}', space=vmem, size = 0x1000, scoped, tag = 'c vmem']
            #allocation25 [shape = 'f32[1024]{0}', space=vmem, size = 0x1000, scoped, tag = 's vmem']
            #allocation26 [shape = 'f32[4096]{0}', space=vmem, size = 0x4000, scoped, tag = 'c broadcast']
            #allocation27 [shape = 'f32[4096]{0}', space=vmem, size = 0x4000, scoped, tag = 's broadcast']
            %s471 = smov [#allocation15]
            %s472 = smov [#allocation19]
            %v473 = vlaneseq
            %v474 = vand.u32 %v473, 127
            %v475 = vmov %v474
            %v476 = vlaneseq
            %v477 = vshrl.u32 %v476, 7
            %v478 = vmov %v477
            %v479 = vld [vmem:[%s471] sm:$0xff]
            %vm482 = vcmp.eq.s32.totalorder %v478, %v475
            %v483 = vsel %vm482, %v479, 0.0
            %v484 = vrot.slane %v483, 4
            %v485 = vadd.f32 %v483, %v484
            %v486 = vrot.slane %v485, 2
            %v487 = vadd.f32 %v485, %v486
            %v488 = vrot.slane %v487, 1
            %v489 = vadd.f32 %v487, %v488
            %490 = vst [vmem:[%s472] sm:$0x1] %v489
            %s491 = smov [#allocation16]
            %s492 = smov [#allocation20]
            %v493 = vlaneseq
            %v494 = vand.u32 %v493, 127
            %v495 = vmov %v494
            %v496 = vlaneseq
            %v497 = vshrl.u32 %v496, 7
            %v498 = vmov %v497
            %v499 = vld [vmem:[%s491] sm:$0xff]
            %vm502 = vcmp.eq.s32.totalorder %v498, %v495
            %v503 = vsel %vm502, %v499, 0.0
            %v504 = vrot.slane %v503, 4
            %v505 = vadd.f32 %v503, %v504
            %v506 = vrot.slane %v505, 2
            %v507 = vadd.f32 %v505, %v506
            %v508 = vrot.slane %v507, 1
            %v509 = vadd.f32 %v507, %v508
            %510 = vst [vmem:[%s492] sm:$0x1] %v509
            %s511 = smov [#allocation18]
            %s512 = smov [#allocation21]
            %v513 = vlaneseq
            %v514 = vand.u32 %v513, 127
            %v515 = vmov %v514
            %v516 = vlaneseq
            %v517 = vshrl.u32 %v516, 7
            %v518 = vmov %v517
            %v519 = vld [vmem:[%s511] sm:$0xff]
            %vm522 = vcmp.eq.s32.totalorder %v518, %v515
            %v523 = vsel %vm522, %v519, 0.0
            %v524 = vrot.slane %v523, 4
            %v525 = vadd.f32 %v523, %v524
            %v526 = vrot.slane %v525, 2
            %v527 = vadd.f32 %v525, %v526
            %v528 = vrot.slane %v527, 1
            %v529 = vadd.f32 %v527, %v528
            %530 = vst [vmem:[%s512] sm:$0x1] %v529
            %s531 = smov [#allocation24]
            %s532 = smov [#allocation25]
            %s533 = smov [#allocation19]
            %v534 = vld [vmem:[%s533] sm:$0xff]
            %s535 = smov [#allocation20]
            %v536 = vld [vmem:[%s535] sm:$0xff]
            %s537 = smov [#allocation21]
            %v538 = vld [vmem:[%s537] sm:$0xff]
            %v539 = vsub.f32 %v538, %v534
            %v540 = vmul.f32 2.0, %v536
            %v541 = vrcp.pop %v540
            %v542 = vmul.f32 %v539, %v541
            %vm543 = vcmp.ge.f32.partialorder %v542, 0.0
            %v544 = vmul.f32 %v542, %v542
            %v545 = vadd.f32 1.0, %v544
            %v546 = vrsqrt.pop %v545
            %v547 = vmul.f32 %v545, %v546
            %vm548 = vcmp.eq.f32.partialorder %v545, inf
            %v549 = vsel %vm548, %v545, %v547
            %vm550 = vcmp.eq.f32.partialorder %v545, 0.0
            %v551 = vand.u32 %v545, 2147483648
            %v552 = vsel %vm550, %v551, %v549
            %v553 = vxor.u32 %v552, 2147483648
            %v554 = vsel %vm543, %v552, %v553
            %v555 = vadd.f32 %v542, %v554
            %v556 = vrcp.pop %v555
            %v557 = vand.u32 2147483647, %v534
            %v558 = vand.u32 2147483647, %v536
            %v559 = vand.u32 2147483647, %v538
            %v560 = vmin.f32 %v557, %v559
            %v561 = vmul.f32 1.1920929e-08, %v560
            %vm562 = vcmp.le.f32.partialorder %v558, %v561
            %v563 = vsel %vm562, 0.0, %v556
            %v564 = vmul.f32 %v563, %v563
            %v565 = vadd.f32 1.0, %v564
            %v566 = vrsqrt.pop %v565
            %v567 = vmul.f32 %v563, %v566
            %v568 = vmul.f32 %v563, %v536
            %v569 = vsub.f32 %v534, %v568
            %v570 = vmul.f32 %v563, %v536
            %v571 = vadd.f32 %v538, %v570
            %s572 = smov [#allocation22]
            %573 = vst [vmem:[%s572] sm:$0xff] %v569
            %s574 = smov [#allocation23]
            %575 = vst [vmem:[%s574] sm:$0xff] %v571
            %s576 = smov %s531
            %577 = vst [vmem:[%s576] sm:$0xff] %v566
            %s578 = smov %s532
            %579 = vst [vmem:[%s578] sm:$0xff] %v567
            %s580 = smov [#allocation24]
            %v581 = vld [vmem:[%s580] ss:$0 sm:$0xff]
            %v582 = vlaneseq
            %v583 = vand.u32 %v582, 127
            %v584 = vmov %v583
            %v585 = vlaneseq
            %v586 = vshrl.u32 %v585, 7
            %v587 = vmov %v586
            %vm589 = vcmp.eq.s32.totalorder %v587, %v584
            %v590 = vsel %vm589, %v581, 0.0
            %591 = vadd.xlane.f32.xlu0 %v590
            %v592 = vpop.xlane.xlu0 %591
            %s593 = smov [#allocation26]
            %594 = vst [vmem:[%s593] sm:$0xff] %v592
            %s595 = smov [#allocation25]
            %v596 = vld [vmem:[%s595] ss:$0 sm:$0xff]
            %v597 = vlaneseq
            %v598 = vand.u32 %v597, 127
            %v599 = vmov %v598
            %v600 = vlaneseq
            %v601 = vshrl.u32 %v600, 7
            %v602 = vmov %v601
            %vm604 = vcmp.eq.s32.totalorder %v602, %v599
            %v605 = vsel %vm604, %v596, 0.0
            %606 = vadd.xlane.f32.xlu0 %v605
            %v607 = vpop.xlane.xlu0 %606
            %s608 = smov [#allocation27]
            %609 = vst [vmem:[%s608] sm:$0xff] %v607
            %s610 = smov [#allocation26]
            %v611 = vld [vmem:[%s610] sm:$0xff]
            %s612 = smov [#allocation27]
            %v613 = vld [vmem:[%s612] sm:$0xff]
            %s614 = smov [#allocation15]
            %s615 = smov [#allocation16]
            %s616 = smov [#allocation17]
            %s617 = smov [#allocation18]
            %v618 = vld [vmem:[%s614] sm:$0xff]
            %v619 = vld [vmem:[%s615] sm:$0xff]
            %v620 = vld [vmem:[%s616] sm:$0xff]
            %v621 = vld [vmem:[%s617] sm:$0xff]
            %v622 = vmul.f32 %v611, %v618
            %v623 = vmul.f32 %v613, %v620
            %v624 = vsub.f32 %v622, %v623
            %v625 = vmul.f32 %v611, %v619
            %v626 = vmul.f32 %v613, %v621
            %v627 = vsub.f32 %v625, %v626
            %v628 = vmul.f32 %v613, %v618
            %v629 = vmul.f32 %v611, %v620
            %v630 = vadd.f32 %v628, %v629
            %v631 = vmul.f32 %v613, %v619
            %v632 = vmul.f32 %v611, %v621
            %v633 = vadd.f32 %v631, %v632
            %634 = vst [vmem:[%s614] sm:$0xff] %v624
            %635 = vst [vmem:[%s615] sm:$0xff] %v627
            %636 = vst [vmem:[%s616] sm:$0xff] %v630
            %637 = vst [vmem:[%s617] sm:$0xff] %v633
            %s638 = smov [#allocation24]
            %v639 = vld [vmem:[%s638] ss:$0 sm:$0xff]
            %s640 = smov [#allocation25]
            %v641 = vld [vmem:[%s640] ss:$0 sm:$0xff]
            %s642 = smov [#allocation15]
            %s643 = smov [#allocation16]
            %s644 = smov [#allocation17]
            %s645 = smov [#allocation18]
            %v646 = vld [vmem:[%s642] sm:$0xff]
            %v647 = vld [vmem:[%s643] sm:$0xff]
            %v648 = vld [vmem:[%s644] sm:$0xff]
            %v649 = vld [vmem:[%s645] sm:$0xff]
            %v650 = vmul.f32 %v639, %v646
            %v651 = vmul.f32 %v641, %v647
            %v652 = vsub.f32 %v650, %v651
            %v653 = vmul.f32 %v641, %v646
            %v654 = vmul.f32 %v639, %v647
            %v655 = vadd.f32 %v653, %v654
            %v656 = vmul.f32 %v639, %v648
            %v657 = vmul.f32 %v641, %v649
            %v658 = vsub.f32 %v656, %v657
            %v659 = vmul.f32 %v641, %v648
            %v660 = vmul.f32 %v639, %v649
            %v661 = vadd.f32 %v659, %v660
            %662 = vst [vmem:[%s642] sm:$0xff] %v652
            %663 = vst [vmem:[%s643] sm:$0xff] %v655
            %664 = vst [vmem:[%s644] sm:$0xff] %v658
            %665 = vst [vmem:[%s645] sm:$0xff] %v661
            %s666 = smov [#allocation15]
            %s667 = smov [#allocation22]
            %v668 = vlaneseq
            %v669 = vand.u32 %v668, 127
            %v670 = vmov %v669
            %v671 = vlaneseq
            %v672 = vshrl.u32 %v671, 7
            %v673 = vmov %v672
            %v674 = vld [vmem:[%s667] ss:$0 sm:$0xff]
            %v675 = vld [vmem:[%s666] sm:$0xff]
            %vm678 = vcmp.eq.s32.totalorder %v673, %v670
            %v679 = vsel %vm678, %v674, %v675
            %680 = vst [vmem:[%s666] sm:$0xff] %v679
            %s681 = smov [#allocation16]
            %v682 = vlaneseq
            %v683 = vand.u32 %v682, 127
            %v684 = vmov %v683
            %v685 = vlaneseq
            %v686 = vshrl.u32 %v685, 7
            %v687 = vmov %v686
            %v688 = vld [vmem:[%s681] sm:$0xff]
            %vm691 = vcmp.eq.s32.totalorder %v687, %v684
            %v692 = vsel %vm691, 0.0, %v688
            %693 = vst [vmem:[%s681] sm:$0xff] %v692
            %s694 = smov [#allocation17]
            %v695 = vlaneseq
            %v696 = vand.u32 %v695, 127
            %v697 = vmov %v696
            %v698 = vlaneseq
            %v699 = vshrl.u32 %v698, 7
            %v700 = vmov %v699
            %v701 = vld [vmem:[%s694] sm:$0xff]
            %vm704 = vcmp.eq.s32.totalorder %v700, %v697
            %v705 = vsel %vm704, 0.0, %v701
            %706 = vst [vmem:[%s694] sm:$0xff] %v705
            %s707 = smov [#allocation18]
            %s708 = smov [#allocation23]
            %v709 = vlaneseq
            %v710 = vand.u32 %v709, 127
            %v711 = vmov %v710
            %v712 = vlaneseq
            %v713 = vshrl.u32 %v712, 7
            %v714 = vmov %v713
            %v715 = vld [vmem:[%s708] ss:$0 sm:$0xff]
            %v716 = vld [vmem:[%s707] sm:$0xff]
            %vm719 = vcmp.eq.s32.totalorder %v714, %v711
            %v720 = vsel %vm719, %v715, %v716
            %721 = vst [vmem:[%s707] sm:$0xff] %v720
            %s722 = smov [#allocation15]
            %s723 = smov [#allocation16]
            %v724 = vld [vmem:[%s723] sm:$0xff]
            %725 = vrot.lane.b32.xlu0 %v724, 1
            %v726 = vpop.permute.xlu0 %725
            %v727 = vld [vmem:[%s722] sm:$0xff]
            %v728 = vld [vmem:[%s722] sm:$0xff]
            %729 = vrot.lane.b32.xlu0 %v728, 1
            %v730 = vpop.permute.xlu0 %729
            %v731 = vlaneseq
            %v732 = vand.u32 %v731, 127
            %vm733 = vcmp.eq.s32.totalorder %v732, 0
            %v734 = vsel %vm733, %v728, %v730
            %v735 = vlaneseq
            %v736 = vand.u32 %v735, 127
            %vm737 = vcmp.eq.s32.totalorder %v736, 1
            %v738 = vsel %vm737, %v726, %v734
            %v739 = vlaneseq
            %v740 = vand.u32 %v739, 127
            %vm741 = vcmp.ge.s32.totalorder %v740, 0
            %vm742 = vcmp.lt.s32.totalorder %v740, 8
            %vm743 = vmand %vm741, %vm742
            %v744 = vsel %vm743, %v738, 0.0
            %v745 = vld [vmem:[%s723] sm:$0xff]
            %746 = vrot.lane.b32.xlu0 %v745, 127
            %v747 = vpop.permute.xlu0 %746
            %v748 = vlaneseq
            %v749 = vand.u32 %v748, 127
            %vm750 = vcmp.eq.s32.totalorder %v749, 7
            %v751 = vsel %vm750, %v727, %v747
            %752 = vst [vmem:[%s722] sm:$0xff] %v744
            %753 = vst [vmem:[%s723] sm:$0xff] %v751
            %s754 = smov [#allocation17]
            %s755 = smov [#allocation18]
            %v756 = vld [vmem:[%s755] sm:$0xff]
            %757 = vrot.lane.b32.xlu0 %v756, 1
            %v758 = vpop.permute.xlu0 %757
            %v759 = vld [vmem:[%s754] sm:$0xff]
            %v760 = vld [vmem:[%s754] sm:$0xff]
            %761 = vrot.lane.b32.xlu0 %v760, 1
            %v762 = vpop.permute.xlu0 %761
            %v763 = vlaneseq
            %v764 = vand.u32 %v763, 127
            %vm765 = vcmp.eq.s32.totalorder %v764, 0
            %v766 = vsel %vm765, %v760, %v762
            %v767 = vlaneseq
            %v768 = vand.u32 %v767, 127
            %vm769 = vcmp.eq.s32.totalorder %v768, 1
            %v770 = vsel %vm769, %v758, %v766
            %v771 = vlaneseq
            %v772 = vand.u32 %v771, 127
            %vm773 = vcmp.ge.s32.totalorder %v772, 0
            %vm774 = vcmp.lt.s32.totalorder %v772, 8
            %vm775 = vmand %vm773, %vm774
            %v776 = vsel %vm775, %v770, 0.0
            %v777 = vld [vmem:[%s755] sm:$0xff]
            %778 = vrot.lane.b32.xlu0 %v777, 127
            %v779 = vpop.permute.xlu0 %778
            %v780 = vlaneseq
            %v781 = vand.u32 %v780, 127
            %vm782 = vcmp.eq.s32.totalorder %v781, 7
            %v783 = vsel %vm782, %v759, %v779
            %784 = vst [vmem:[%s754] sm:$0xff] %v776
            %785 = vst [vmem:[%s755] sm:$0xff] %v783
            %s786 = smov [#allocation15]
            %s787 = smov [#allocation17]
            %v788 = vld [vmem:[%s786] ss:$0 sm:$0xff]
            %s790 = scalar_lea.vmem %s786, 4294967295
            %v791 = vld [vmem:[%s790] sm:$0xfe]
            %v792 = vlaneseq
            %v793 = vshrl.u32 %v792, 7
            %vm794 = vcmp.eq.s32.totalorder %v793, 0
            %v795 = vsel %vm794, %v788, %v791
            %s796 = scalar_lea.vmem %s786, 7
            %v797 = vld [vmem:[%s796] ss:$0 sm:$0xff]
            %798 = vst [vmem:[%s786] sm:$0xff] %v795
            %v799 = vld [vmem:[%s787] ss:$0 sm:$0xff]
            %s800 = scalar_lea.vmem %s786, 1
            %801 = vst [vmem:[%s800] sm:$0x1] %v799
            %s802 = scalar_lea.vmem %s787, 1
            %v803 = vld [vmem:[%s802] sm:$0x7f]
            %v804 = vlaneseq
            %v805 = vshrl.u32 %v804, 7
            %vm806 = vcmp.eq.s32.totalorder %v805, 7
            %v807 = vsel %vm806, %v797, %v803
            %v808 = vld [vmem:[%s787] ss:$0 sm:$0xff]
            %809 = vst [vmem:[%s787] sm:$0xff] %v807
            %s810 = smov [#allocation16]
            %s811 = smov [#allocation18]
            %v812 = vld [vmem:[%s810] ss:$0 sm:$0xff]
            %s814 = scalar_lea.vmem %s810, 4294967295
            %v815 = vld [vmem:[%s814] sm:$0xfe]
            %v816 = vlaneseq
            %v817 = vshrl.u32 %v816, 7
            %vm818 = vcmp.eq.s32.totalorder %v817, 0
            %v819 = vsel %vm818, %v812, %v815
            %s820 = scalar_lea.vmem %s810, 7
            %v821 = vld [vmem:[%s820] ss:$0 sm:$0xff]
            %822 = vst [vmem:[%s810] sm:$0xff] %v819
            %v823 = vld [vmem:[%s811] ss:$0 sm:$0xff]
            %s824 = scalar_lea.vmem %s810, 1
            %825 = vst [vmem:[%s824] sm:$0x1] %v823
            %s826 = scalar_lea.vmem %s811, 1
            %v827 = vld [vmem:[%s826] sm:$0x7f]
            %v828 = vlaneseq
            %v829 = vshrl.u32 %v828, 7
            %vm830 = vcmp.eq.s32.totalorder %v829, 7
            %v831 = vsel %vm830, %v821, %v827
            %v832 = vld [vmem:[%s811] ss:$0 sm:$0xff]
            %833 = vst [vmem:[%s811] sm:$0xff] %v831
            %s834 = smov [#allocation26]
            %v835 = vld [vmem:[%s834] sm:$0xff]
            %s836 = smov [#allocation27]
            %v837 = vld [vmem:[%s836] sm:$0xff]
            %s838 = smov %s307
            %s839 = smov %s312
            %s840 = smov %s317
            %s841 = smov %s322
            %v842 = vld [vmem:[%s838] sm:$0xff]
            %v843 = vld [vmem:[%s839] sm:$0xff]
            %v844 = vld [vmem:[%s840] sm:$0xff]
            %v845 = vld [vmem:[%s841] sm:$0xff]
            %v846 = vmul.f32 %v835, %v842
            %v847 = vmul.f32 %v837, %v844
            %v848 = vsub.f32 %v846, %v847
            %v849 = vmul.f32 %v835, %v843
            %v850 = vmul.f32 %v837, %v845
            %v851 = vsub.f32 %v849, %v850
            %v852 = vmul.f32 %v837, %v842
            %v853 = vmul.f32 %v835, %v844
            %v854 = vadd.f32 %v852, %v853
            %v855 = vmul.f32 %v837, %v843
            %v856 = vmul.f32 %v835, %v845
            %v857 = vadd.f32 %v855, %v856
            %858 = vst [vmem:[%s838] sm:$0xff] %v848
            %859 = vst [vmem:[%s839] sm:$0xff] %v851
            %860 = vst [vmem:[%s840] sm:$0xff] %v854
            %861 = vst [vmem:[%s841] sm:$0xff] %v857
            %s862 = smov %s307
            %s863 = smov %s317
            %v864 = vld [vmem:[%s862] ss:$0 sm:$0xff]
            %s866 = scalar_lea.vmem %s862, 4294967295
            %v867 = vld [vmem:[%s866] sm:$0xfe]
            %v868 = vlaneseq
            %v869 = vshrl.u32 %v868, 7
            %vm870 = vcmp.eq.s32.totalorder %v869, 0
            %v871 = vsel %vm870, %v864, %v867
            %s872 = scalar_lea.vmem %s862, 7
            %v873 = vld [vmem:[%s872] ss:$0 sm:$0xff]
            %874 = vst [vmem:[%s862] sm:$0xff] %v871
            %v875 = vld [vmem:[%s863] ss:$0 sm:$0xff]
            %s876 = scalar_lea.vmem %s862, 1
            %877 = vst [vmem:[%s876] sm:$0x1] %v875
            %s878 = scalar_lea.vmem %s863, 1
            %v879 = vld [vmem:[%s878] sm:$0x7f]
            %v880 = vlaneseq
            %v881 = vshrl.u32 %v880, 7
            %vm882 = vcmp.eq.s32.totalorder %v881, 7
            %v883 = vsel %vm882, %v873, %v879
            %v884 = vld [vmem:[%s863] ss:$0 sm:$0xff]
            %885 = vst [vmem:[%s863] sm:$0xff] %v883
            %s886 = smov %s312
            %s887 = smov %s322
            %v888 = vld [vmem:[%s886] ss:$0 sm:$0xff]
            %s890 = scalar_lea.vmem %s886, 4294967295
            %v891 = vld [vmem:[%s890] sm:$0xfe]
            %v892 = vlaneseq
            %v893 = vshrl.u32 %v892, 7
            %vm894 = vcmp.eq.s32.totalorder %v893, 0
            %v895 = vsel %vm894, %v888, %v891
            %s896 = scalar_lea.vmem %s886, 7
            %v897 = vld [vmem:[%s896] ss:$0 sm:$0xff]
            %898 = vst [vmem:[%s886] sm:$0xff] %v895
            %v899 = vld [vmem:[%s887] ss:$0 sm:$0xff]
            %s900 = scalar_lea.vmem %s886, 1
            %901 = vst [vmem:[%s900] sm:$0x1] %v899
            %s902 = scalar_lea.vmem %s887, 1
            %v903 = vld [vmem:[%s902] sm:$0x7f]
            %v904 = vlaneseq
            %v905 = vshrl.u32 %v904, 7
            %vm906 = vcmp.eq.s32.totalorder %v905, 7
            %v907 = vsel %vm906, %v897, %v903
            %v908 = vld [vmem:[%s887] ss:$0 sm:$0xff]
            %909 = vst [vmem:[%s887] sm:$0xff] %v907
          $region168: #{custom-call.3} parent=160 // loop_footer
            %s470 = sadd.s32 1, %s466
          $region169: #{custom-call.3} parent=160 // loop_footer_branch
            %465 = sbr.rel target = $region165
          $region170: #{custom-call.3} parent=160 // loop_exit
            _
          %s910 = sadd.s32 %s368, 1
        $region161: #{custom-call.3} parent=155 // loop_footer
          _
        $region162: #{custom-call.3} parent=155 // loop_footer_branch
          %367 = sbr.rel target = $region158
        $region163: #{custom-call.3} parent=155 // loop_exit
          _
        %s913 = sand.u32 %s26, 7
        %s914 = scalar_lea.vmem [#allocation4], %s913
        %s915 = sand.u32 %s26, 7
        %s916 = scalar_lea.vmem [#allocation6], %s915
        %s917 = smov [#allocation15]
        %s918 = smov %s914
        %v919 = vlaneseq
        %v920 = vand.u32 %v919, 127
        %v921 = vmov %v920
        %v922 = vlaneseq
        %v923 = vshrl.u32 %v922, 7
        %v924 = vmov %v923
        %v925 = vld [vmem:[%s917] sm:$0xff]
        %vm928 = vcmp.eq.s32.totalorder %v924, %v921
        %v929 = vsel %vm928, %v925, 0.0
        %v930 = vrot.slane %v929, 4
        %v931 = vadd.f32 %v929, %v930
        %v932 = vrot.slane %v931, 2
        %v933 = vadd.f32 %v931, %v932
        %v934 = vrot.slane %v933, 1
        %v935 = vadd.f32 %v933, %v934
        %936 = vst [vmem:[%s918] sm:$0x1] %v935
        %s937 = smov [#allocation18]
        %s938 = smov %s916
        %v939 = vlaneseq
        %v940 = vand.u32 %v939, 127
        %v941 = vmov %v940
        %v942 = vlaneseq
        %v943 = vshrl.u32 %v942, 7
        %v944 = vmov %v943
        %v945 = vld [vmem:[%s937] sm:$0xff]
        %vm948 = vcmp.eq.s32.totalorder %v944, %v941
        %v949 = vsel %vm948, %v945, 0.0
        %v950 = vrot.slane %v949, 4
        %v951 = vadd.f32 %v949, %v950
        %v952 = vrot.slane %v951, 2
        %v953 = vadd.f32 %v951, %v952
        %v954 = vrot.slane %v953, 1
        %v955 = vadd.f32 %v953, %v954
        %956 = vst [vmem:[%s938] sm:$0x1] %v955
        %s958 = sshll.u32 1, 4
        %s959 = ssub.s32 %s958, 1
        %v961 = vld [vmem:[#allocation4] sm:%s959]
        %s962 = sshll.u32 1, 4
        %s963 = ssub.s32 %s962, 1
        %964 = vst [vmem:[%s296] sm:%s963] %v961
        %s966 = sshll.u32 1, 4
        %s967 = ssub.s32 %s966, 1
        %v969 = vld [vmem:[#allocation6] sm:%s967]
        %s970 = sshll.u32 1, 4
        %s971 = ssub.s32 %s970, 1
        %972 = vst [vmem:[%s302] sm:%s971] %v969
        %s973 = sand.u32 %s36, 1
        %s974 = sand.u32 %s36, 1
        %s975 = smul.addr %s974, 4
        %s976 = scalar_lea.vmem [#allocation5], %s975
        %s977 = sand.u32 %s64, 1
        %s978 = sand.u32 %s64, 1
        %s979 = smul.addr %s978, 4
        %s980 = scalar_lea.vmem [#allocation7], %s979
        %s981 = sand.u32 %s26, 1
        %s982 = scalar_lea.sflag [#allocation9], %s981
        %s983 = sand.u32 %s26, 1
        %s984 = smul.addr %s983, 8
        %s985 = scalar_lea.vmem [#allocation8], %s984
        %s986 = sand.u32 %s26, 1
        %s987 = scalar_lea.sflag [#allocation11], %s986
        %s988 = sand.u32 %s26, 1
        %s989 = smul.addr %s988, 8
        %s990 = scalar_lea.vmem [#allocation10], %s989
        %s991 = sand.u32 %s26, 1
        %s992 = scalar_lea.sflag [#allocation11], %s991
        %s993 = sand.u32 %s26, 1
        %s994 = smul.addr %s993, 8
        %s995 = scalar_lea.vmem [#allocation12], %s994
        %s996 = sand.u32 %s26, 1
        %s997 = scalar_lea.sflag [#allocation14], %s996
        %s998 = sand.u32 %s26, 1
        %s999 = smul.addr %s998, 8
        %s1000 = scalar_lea.vmem [#allocation13], %s999
        // Predicated region
        $region171: #{custom-call.3} parent=155 // pred_check
          %p1001 = pneg %p46
        $region172: #{custom-call.3} parent=155 // pred_check_branch
          %1003 = sbr.rel (%p1001) target = $region174
        $region173: #{custom-call.3} parent=155 // pred_region
          %s1004 = sshrl.u32 %s26, 3
          %s1005 = smul.addr %s1004, 4
          %s1006 = scalar_lea.vmem %s4, %s1005
          // Predicated region
          $region175: #{custom-call.3} parent=173 // pred_check
            _
          $region176: #{custom-call.3} parent=173 // pred_check_branch
            %1008 = sbr.rel (0) target = $region178
          $region177: #{custom-call.3} parent=173 // pred_region
            // Predicated region
            $region179: #{custom-call.3} parent=177 // pred_check
              _
            $region180: #{custom-call.3} parent=177 // pred_check_branch
              %1010 = sbr.rel target = $region182
            $region181: #{custom-call.3} parent=177 // pred_region
              // Predicated region
              $region194: #{custom-call.3} parent=181 // pred_check
                _
              $region195: #{custom-call.3} parent=181 // pred_check_branch
                %1026 = sbr.rel (0) target = $region197
              $region196: #{custom-call.3} parent=181 // pred_region
                %s1028 = ssub.s32 16, 1
                loop: start=0, step=1, limit=1
                $region198: #{custom-call.3} parent=196 // loop_pre_header
                  _
                $region199: #{custom-call.3} parent=196 // loop_header
                  %s1030 = sphi 0, %s1034
                  %p1031 = scmp.ge.s32.totalorder %s1030, 1
                  %s1035 = sphi %s976, %s976
                  %s1036 = sphi %s1006, %s1006
                $region200: #{custom-call.3} parent=196 // loop_header_branch
                  %1033 = sbr.rel (%p1031) target = $region204
                $region201: #{custom-call.3} parent=196 // loop_body
                  %v1037 = vld [vmem:[%s1035] sm:%s1028]
                  %1038 = vst [vmem:[%s1036] sm:%s1028] %v1037
                $region202: #{custom-call.3} parent=196 // loop_footer
                  %s1034 = sadd.s32 1, %s1030
                $region203: #{custom-call.3} parent=196 // loop_footer_branch
                  %1029 = sbr.rel target = $region199
                $region204: #{custom-call.3} parent=196 // loop_exit
                  _
              $region197: #{custom-call.3} parent=181 // pred_fallthru
                _
            $region182: #{custom-call.3} parent=177 // pred_fallthru
              _
            // Predicated region
            $region183: #{custom-call.3} parent=177 // pred_check
              _
            $region184: #{custom-call.3} parent=177 // pred_check_branch
              %1012 = sbr.rel (0) target = $region186
            $region185: #{custom-call.3} parent=177 // pred_region
              %s1014 = ssub.s32 16, 1
              loop: start=0, step=1, limit=1
              $region187: #{custom-call.3} parent=185 // loop_pre_header
                _
              $region188: #{custom-call.3} parent=185 // loop_header
                %s1016 = sphi 0, %s1020
                %p1017 = scmp.ge.s32.totalorder %s1016, 1
                %s1021 = sphi %s976, %s976
                %s1022 = sphi %s1006, %s1006
              $region189: #{custom-call.3} parent=185 // loop_header_branch
                %1019 = sbr.rel (%p1017) target = $region193
              $region190: #{custom-call.3} parent=185 // loop_body
                %v1023 = vld [vmem:[%s1021] sm:%s1014]
                %1024 = vst [vmem:[%s1022] sm:%s1014] %v1023
              $region191: #{custom-call.3} parent=185 // loop_footer
                %s1020 = sadd.s32 1, %s1016
              $region192: #{custom-call.3} parent=185 // loop_footer_branch
                %1015 = sbr.rel target = $region188
              $region193: #{custom-call.3} parent=185 // loop_exit
                _
            $region186: #{custom-call.3} parent=177 // pred_fallthru
              _
          $region178: #{custom-call.3} parent=173 // pred_fallthru
            _
          %1039 = vnop
        $region174: #{custom-call.3} parent=155 // pred_fallthru
          _
        // Predicated region
        $region205: #{custom-call.3} parent=155 // pred_check
          %p1040 = pneg %p74
        $region206: #{custom-call.3} parent=155 // pred_check_branch
          %1042 = sbr.rel (%p1040) target = $region208
        $region207: #{custom-call.3} parent=155 // pred_region
          %s1043 = sshrl.u32 %s26, 3
          %s1044 = smul.addr %s1043, 4
          %s1045 = scalar_lea.vmem %s5, %s1044
          // Predicated region
          $region209: #{custom-call.3} parent=207 // pred_check
            _
          $region210: #{custom-call.3} parent=207 // pred_check_branch
            %1047 = sbr.rel (0) target = $region212
          $region211: #{custom-call.3} parent=207 // pred_region
            // Predicated region
            $region213: #{custom-call.3} parent=211 // pred_check
              _
            $region214: #{custom-call.3} parent=211 // pred_check_branch
              %1049 = sbr.rel target = $region216
            $region215: #{custom-call.3} parent=211 // pred_region
              // Predicated region
              $region228: #{custom-call.3} parent=215 // pred_check
                _
              $region229: #{custom-call.3} parent=215 // pred_check_branch
                %1065 = sbr.rel (0) target = $region231
              $region230: #{custom-call.3} parent=215 // pred_region
                %s1067 = ssub.s32 16, 1
                loop: start=0, step=1, limit=1
                $region232: #{custom-call.3} parent=230 // loop_pre_header
                  _
                $region233: #{custom-call.3} parent=230 // loop_header
                  %s1069 = sphi 0, %s1073
                  %p1070 = scmp.ge.s32.totalorder %s1069, 1
                  %s1074 = sphi %s980, %s980
                  %s1075 = sphi %s1045, %s1045
                $region234: #{custom-call.3} parent=230 // loop_header_branch
                  %1072 = sbr.rel (%p1070) target = $region238
                $region235: #{custom-call.3} parent=230 // loop_body
                  %v1076 = vld [vmem:[%s1074] sm:%s1067]
                  %1077 = vst [vmem:[%s1075] sm:%s1067] %v1076
                $region236: #{custom-call.3} parent=230 // loop_footer
                  %s1073 = sadd.s32 1, %s1069
                $region237: #{custom-call.3} parent=230 // loop_footer_branch
                  %1068 = sbr.rel target = $region233
                $region238: #{custom-call.3} parent=230 // loop_exit
                  _
              $region231: #{custom-call.3} parent=215 // pred_fallthru
                _
            $region216: #{custom-call.3} parent=211 // pred_fallthru
              _
            // Predicated region
            $region217: #{custom-call.3} parent=211 // pred_check
              _
            $region218: #{custom-call.3} parent=211 // pred_check_branch
              %1051 = sbr.rel (0) target = $region220
            $region219: #{custom-call.3} parent=211 // pred_region
              %s1053 = ssub.s32 16, 1
              loop: start=0, step=1, limit=1
              $region221: #{custom-call.3} parent=219 // loop_pre_header
                _
              $region222: #{custom-call.3} parent=219 // loop_header
                %s1055 = sphi 0, %s1059
                %p1056 = scmp.ge.s32.totalorder %s1055, 1
                %s1060 = sphi %s980, %s980
                %s1061 = sphi %s1045, %s1045
              $region223: #{custom-call.3} parent=219 // loop_header_branch
                %1058 = sbr.rel (%p1056) target = $region227
              $region224: #{custom-call.3} parent=219 // loop_body
                %v1062 = vld [vmem:[%s1060] sm:%s1053]
                %1063 = vst [vmem:[%s1061] sm:%s1053] %v1062
              $region225: #{custom-call.3} parent=219 // loop_footer
                %s1059 = sadd.s32 1, %s1055
              $region226: #{custom-call.3} parent=219 // loop_footer_branch
                %1054 = sbr.rel target = $region222
              $region227: #{custom-call.3} parent=219 // loop_exit
                _
            $region220: #{custom-call.3} parent=211 // pred_fallthru
              _
          $region212: #{custom-call.3} parent=207 // pred_fallthru
            _
          %1078 = vnop
        $region208: #{custom-call.3} parent=155 // pred_fallthru
          _
        %s1080 = ssub.s32 128, 128
        %1081 = vsyncadd %s982, %s1080
        %s1082 = smul.addr %s26, 128
        %s1083 = scalar_lea.hbm %s6, %s1082
        %s1085 = sshll.u32 %s985, 4
        %s1086 = int_to_ptr.vmem [resolvable:$true] %s1085
        %1088 = dma.vmem_to_hbm [thread:$0]  %s1086, 128, %s1083, %s982
        %s1090 = ssub.s32 128, 128
        %1091 = vsyncadd %s987, %s1090
        %s1092 = smul.addr %s26, 128
        %s1093 = scalar_lea.hbm %s7, %s1092
        %s1095 = sshll.u32 %s990, 4
        %s1096 = int_to_ptr.vmem [resolvable:$true] %s1095
        %1098 = dma.vmem_to_hbm [thread:$0]  %s1096, 128, %s1093, %s987
        %s1100 = ssub.s32 128, 128
        %1101 = vsyncadd %s992, %s1100
        %s1102 = smul.addr %s26, 128
        %s1103 = scalar_lea.hbm %s8, %s1102
        %s1105 = sshll.u32 %s995, 4
        %s1106 = int_to_ptr.vmem [resolvable:$true] %s1105
        %1108 = dma.vmem_to_hbm [thread:$0]  %s1106, 128, %s1103, %s992
        %s1110 = ssub.s32 128, 128
        %1111 = vsyncadd %s997, %s1110
        %s1112 = smul.addr %s26, 128
        %s1113 = scalar_lea.hbm %s9, %s1112
        %s1115 = sshll.u32 %s1000, 4
        %s1116 = int_to_ptr.vmem [resolvable:$true] %s1115
        %1118 = dma.vmem_to_hbm [thread:$0]  %s1116, 128, %s1113, %s997
      $region156: #{custom-call.3} parent=5 // pred_fallthru
        _
      %p1119 = scmp.le.s32.totalorder 2, %s21
      // Predicated region
      $region239: #{custom-call.3} parent=5 // pred_check
        %p1120 = pneg %p1119
      $region240: #{custom-call.3} parent=5 // pred_check_branch
        %1122 = sbr.rel (%p1120) target = $region242
      $region241: #{custom-call.3} parent=5 // pred_region
        %s1123 = ssub.s32 %s21, 2
        // Predicated region
        $region243: #{custom-call.3} parent=241 // pred_check
          %p1124 = pneg %p52
        $region244: #{custom-call.3} parent=241 // pred_check_branch
          %1126 = sbr.rel (%p1124) target = $region246
        $region245: #{custom-call.3} parent=241 // pred_region
          %s1127 = sand.u32 %s37, 1
          %s1128 = sand.u32 %s37, 1
          %s1129 = smul.addr %s1128, 4
          %s1130 = scalar_lea.vmem [#allocation5], %s1129
        $region246: #{custom-call.3} parent=241 // pred_fallthru
          _
        // Predicated region
        $region247: #{custom-call.3} parent=241 // pred_check
          %p1131 = pneg %p80
        $region248: #{custom-call.3} parent=241 // pred_check_branch
          %1133 = sbr.rel (%p1131) target = $region250
        $region249: #{custom-call.3} parent=241 // pred_region
          %s1134 = sand.u32 %s65, 1
          %s1135 = sand.u32 %s65, 1
          %s1136 = smul.addr %s1135, 4
          %s1137 = scalar_lea.vmem [#allocation7], %s1136
        $region250: #{custom-call.3} parent=241 // pred_fallthru
          _
        %s1138 = sand.u32 %s27, 1
        %s1139 = scalar_lea.sflag [#allocation9], %s1138
        %s1140 = sand.u32 %s27, 1
        %s1141 = smul.addr %s1140, 8
        %s1142 = scalar_lea.vmem [#allocation8], %s1141
        %1143 = dma.done %s1139, 128
        %s1144 = sand.u32 %s27, 1
        %s1145 = scalar_lea.sflag [#allocation11], %s1144
        %s1146 = sand.u32 %s27, 1
        %s1147 = smul.addr %s1146, 8
        %s1148 = scalar_lea.vmem [#allocation10], %s1147
        %1149 = dma.done %s1145, 128
        %s1150 = sand.u32 %s27, 1
        %s1151 = scalar_lea.sflag [#allocation11], %s1150
        %s1152 = sand.u32 %s27, 1
        %s1153 = smul.addr %s1152, 8
        %s1154 = scalar_lea.vmem [#allocation12], %s1153
        %1155 = dma.done %s1151, 128
        %s1156 = sand.u32 %s27, 1
        %s1157 = scalar_lea.sflag [#allocation14], %s1156
        %s1158 = sand.u32 %s27, 1
        %s1159 = smul.addr %s1158, 8
        %s1160 = scalar_lea.vmem [#allocation13], %s1159
        %1161 = dma.done %s1157, 128
      $region242: #{custom-call.3} parent=5 // pred_fallthru
        _
    $region6: #{custom-call.3} parent=1 // loop_footer
      %s25 = sadd.s32 1, %s21
    $region7: #{custom-call.3} parent=1 // loop_footer_branch
      %20 = sbr.rel target = $region3
    $region8: #{custom-call.3} parent=1 // loop_exit
      _
    %1162 = vsyncpa [#allocation9], 1
    %s1163 = scalar_lea.sflag [#allocation9], 1
    %1164 = vsyncpa %s1163, 1
    %1165 = vsyncpa [#allocation11], 1
    %s1166 = scalar_lea.sflag [#allocation11], 1
    %1167 = vsyncpa %s1166, 1
    %1168 = vsyncpa [#allocation14], 1
    %s1169 = scalar_lea.sflag [#allocation14], 1
    %1170 = vsyncpa %s1169, 1

// kernel: _loss_impl.1
$region0: #{_loss_impl.1}
  #allocation0 [shape = 'u32[]', space=smem, size = 0x4, offset = 0x4, fixed_abs, tag = 'smem constant byte address 0x4 - core index']
  #allocation1 [shape = 'u32[144,128]{1,0:T(1,128)}', space=vmem, size = 0x12000, scoped, tag = 'internal scratch']
  #allocation2 [shape = 'f32[256,256]{1,0:T(8,128)}', space=vmem, size = 0x40000, scoped, tag = 'scratch operand']
  %s0 = inlined_call_operand.hbm [shape: f32[16,16], index: 0, kind: input, shape index: {}]
  %s1 = inlined_call_operand.hbm [shape: f32[16,256], index: 1, kind: input, shape index: {}]
  %s2 = inlined_call_operand.vmem [shape: f32[16,256], index: 2, kind: output, shape index: {0}]
  %s3 = inlined_call_operand.hbm [shape: f32[1,1,1], index: 3, kind: output, shape index: {1}]
  %4 = xla_tuple %s2, %s3
  %s5 = sld [smem:[#allocation0]]
  $region34: #{_loss_impl.1} parent=0
    _
  %s7 = ssub.s32 1, %s5
  %s8 = scalar_select 0, %s7, %s5
  $region1: #{_loss_impl.1} parent=0
    #allocation3 [shape = 'u8[8192]{0}', space=vmem, size = 0x2000, scoped, tag = 'input window, operand 0, single buffered']
    #allocation4 [shape = 's32[1]{0}', space=sflag, size = 0x4, scoped, tag = 'scoped memory for _loss_impl.1']
    #allocation5 [shape = 's32[1]{0}', space=sflag, size = 0x4, scoped, tag = 'scoped memory for _loss_impl.1']
    #allocation6 [shape = 'u8[16384]{0}', space=vmem, size = 0x4000, scoped, tag = 'input window, operand 1, single buffered']
    #allocation7 [shape = 's32[1]{0}', space=sflag, size = 0x4, scoped, tag = 'scoped memory for _loss_impl.1']
    #allocation8 [shape = 'u8[512]{0}', space=vmem, size = 0x400, scoped, tag = 'output window, operand 1, single buffered']
    %9 = vsyncpa [#allocation4], 0
    %10 = vsyncpa [#allocation7], 0
    %11 = vsyncpa [#allocation5], 0
    // Predicated region
    $region2: #{_loss_impl.1} parent=1 // pred_check
      _
    $region3: #{_loss_impl.1} parent=1 // pred_check_branch
      %13 = sbr.rel (0) target = $region5
    $region4: #{_loss_impl.1} parent=1 // pred_region
      %s15 = ssub.s32 256, 256
      %16 = vsyncadd [#allocation4], %s15
      %s17 = sshll.u32 [#allocation3], 4
      %s18 = int_to_ptr.vmem [resolvable:$true] %s17
      %23 = dma.hbm_to_vmem [thread:$0]  %s0, 256, %s18, [#allocation4], 128, 128, 8
    $region5: #{_loss_impl.1} parent=1 // pred_fallthru
      _
    // Predicated region
    $region6: #{_loss_impl.1} parent=1 // pred_check
      _
    $region7: #{_loss_impl.1} parent=1 // pred_check_branch
      %25 = sbr.rel (0) target = $region9
    $region8: #{_loss_impl.1} parent=1 // pred_region
      %s27 = ssub.s32 512, 512
      %28 = vsyncadd [#allocation7], %s27
      %s29 = sshll.u32 [#allocation6], 4
      %s30 = int_to_ptr.vmem [resolvable:$true] %s29
      %35 = dma.hbm_to_vmem [thread:$0]  %s1, 512, %s30, [#allocation7], 256, 256, 16
    $region9: #{_loss_impl.1} parent=1 // pred_fallthru
      _
    // Predicated region
    $region10: #{_loss_impl.1} parent=1 // pred_check
      _
    $region11: #{_loss_impl.1} parent=1 // pred_check_branch
      %37 = sbr.rel (0) target = $region13
    $region12: #{_loss_impl.1} parent=1 // pred_region
      %38 = dma.done [#allocation4], 256
    $region13: #{_loss_impl.1} parent=1 // pred_fallthru
      _
    // Predicated region
    $region14: #{_loss_impl.1} parent=1 // pred_check
      _
    $region15: #{_loss_impl.1} parent=1 // pred_check_branch
      %40 = sbr.rel (0) target = $region17
    $region16: #{_loss_impl.1} parent=1 // pred_region
      %41 = dma.done [#allocation7], 512
    $region17: #{_loss_impl.1} parent=1 // pred_fallthru
      _
    %v42 = vld [vmem:[#allocation3] sm:$0xff]
    %v43 = vld [vmem:[#allocation3 + $0x8] sm:$0xff]
    %v44 = vld [vmem:[#allocation6] sm:$0xff]
    %v45 = vld [vmem:[#allocation6 + $0x8] sm:$0xff]
    %v46 = vld [vmem:[#allocation6 + $0x10] sm:$0xff]
    %v47 = vld [vmem:[#allocation6 + $0x18] sm:$0xff]
    %vm48 = vcmask 130048
    %v50 = vsel %vm48, %v42, 0
    %v53 = vsel %vm48, %v43, 0
    %55 = vmatprep.subr.mxu0 0.0
    %56 = vmatpush1.msra.mxu0 0.0
    %57 = vmatprep.subr.mxu0 0.0
    %58 = vmatpush1.msra.mxu0 0.0
    %59 = vmatprep.subr.mxu0 0.0
    %60 = vmatpush1.msra.mxu0 0.0
    %61 = vmatprep.subr.mxu0 0.0
    %62 = vmatpush1.msra.mxu0 0.0
    %63 = vmatprep.subr.mxu0 0.0
    %64 = vmatpush1.msra.mxu0 0.0
    %65 = vmatprep.subr.mxu0 0.0
    %66 = vmatpush1.msra.mxu0 0.0
    %67 = vmatprep.subr.mxu0 0.0
    %68 = vmatpush1.msra.mxu0 0.0
    %69 = vmatprep.subr.mxu0 0.0
    %70 = vmatpush1.msra.mxu0 0.0
    %71 = vmatprep.subr.mxu0 0.0
    %72 = vmatpush1.msra.mxu0 0.0
    %73 = vmatprep.subr.mxu0 0.0
    %74 = vmatpush1.msra.mxu0 0.0
    %75 = vmatprep.subr.mxu0 0.0
    %76 = vmatpush1.msra.mxu0 0.0
    %77 = vmatprep.subr.mxu0 0.0
    %78 = vmatpush1.msra.mxu0 0.0
    %79 = vmatprep.subr.mxu0 0.0
    %80 = vmatpush1.msra.mxu0 0.0
    %81 = vmatprep.subr.mxu0 0.0
    %82 = vmatpush1.msra.mxu0 0.0
    %83 = vmatprep.subr.mxu0 %v47
    %84 = vmatpush1.msra.mxu0 %v46
    %85 = vmatprep.subr.mxu0 %v45
    %86 = vmatpush1.msra.mxu0 %v44
    %87 = vmatprep.subr.mxu0 0.0
    %88 = vmatpush2.msra.mxu0 0.0
    %89 = vmatprep.subr.mxu0 0.0
    %90 = vmatpush2.msra.mxu0 0.0
    %91 = vmatprep.subr.mxu0 0.0
    %92 = vmatpush2.msra.mxu0 0.0
    %93 = vmatprep.subr.mxu0 0.0
    %94 = vmatpush2.msra.mxu0 0.0
    %95 = vmatprep.subr.mxu0 0.0
    %96 = vmatpush2.msra.mxu0 0.0
    %97 = vmatprep.subr.mxu0 0.0
    %98 = vmatpush2.msra.mxu0 0.0
    %99 = vmatprep.subr.mxu0 0.0
    %100 = vmatpush2.msra.mxu0 0.0
    %101 = vmatprep.subr.mxu0 0.0
    %102 = vmatpush2.msra.mxu0 0.0
    %103 = vmatprep.subr.mxu0 0.0
    %104 = vmatpush2.msra.mxu0 0.0
    %105 = vmatprep.subr.mxu0 0.0
    %106 = vmatpush2.msra.mxu0 0.0
    %107 = vmatprep.subr.mxu0 0.0
    %108 = vmatpush2.msra.mxu0 0.0
    %109 = vmatprep.subr.mxu0 0.0
    %110 = vmatpush2.msra.mxu0 0.0
    %111 = vmatprep.subr.mxu0 0.0
    %112 = vmatpush2.msra.mxu0 0.0
    %113 = vmatprep.subr.mxu0 0.0
    %114 = vmatpush2.msra.mxu0 0.0
    %115 = vmatprep.subr.mxu0 0.0
    %116 = vmatpush2.msra.mxu0 0.0
    %117 = vmatprep.subr.mxu0 0.0
    %118 = vmatpush2.msra.mxu0 0.0
    %119 = vmatprep.mubr.f32.mxu0 0.0
    %120 = vmatmul.mubr.f32.gmra.mxu0 %v50
    %v121 = vpop.f32.mrf.mxu0
    %v122 = vadd.f32 0.0, %v121
    %v123 = vpop.f32.mrf.mxu0
    %v124 = vadd.f32 0.0, %v123
    %125 = vmatprep.mubr.f32.mxu0 0.0
    %126 = vmatmul.mubr.f32.gmra.mxu0 %v53
    %v127 = vpop.f32.mrf.mxu0
    %v128 = vadd.f32 0.0, %v127
    %v129 = vpop.f32.mrf.mxu0
    %v130 = vadd.f32 0.0, %v129
    %131 = vdwg.mxu0
    %132 = vst [vmem:[#allocation2] sm:$0xff] 0.0
    %133 = vst [vmem:[#allocation2 + $0x8] sm:$0xff] 0.0
    %134 = vst [vmem:[#allocation2 + $0x10] sm:$0xff] 0.0
    %135 = vst [vmem:[#allocation2 + $0x18] sm:$0xff] 0.0
    %136 = vst [vmem:[#allocation2 + $0x20] sm:$0xff] 0.0
    %137 = vst [vmem:[#allocation2 + $0x28] sm:$0xff] 0.0
    %138 = vst [vmem:[#allocation2 + $0x30] sm:$0xff] 0.0
    %139 = vst [vmem:[#allocation2 + $0x38] sm:$0xff] 0.0
    %140 = vst [vmem:[#allocation2 + $0x40] sm:$0xff] 0.0
    %141 = vst [vmem:[#allocation2 + $0x48] sm:$0xff] 0.0
    %142 = vst [vmem:[#allocation2 + $0x50] sm:$0xff] 0.0
    %143 = vst [vmem:[#allocation2 + $0x58] sm:$0xff] 0.0
    %144 = vst [vmem:[#allocation2 + $0x60] sm:$0xff] 0.0
    %145 = vst [vmem:[#allocation2 + $0x68] sm:$0xff] 0.0
    %146 = vst [vmem:[#allocation2 + $0x70] sm:$0xff] 0.0
    %147 = vst [vmem:[#allocation2 + $0x78] sm:$0xff] 0.0
    %148 = vst [vmem:[#allocation2 + $0x80] sm:$0xff] 0.0
    %149 = vst [vmem:[#allocation2 + $0x88] sm:$0xff] 0.0
    %150 = vst [vmem:[#allocation2 + $0x90] sm:$0xff] 0.0
    %151 = vst [vmem:[#allocation2 + $0x98] sm:$0xff] 0.0
    %152 = vst [vmem:[#allocation2 + $0xa0] sm:$0xff] 0.0
    %153 = vst [vmem:[#allocation2 + $0xa8] sm:$0xff] 0.0
    %154 = vst [vmem:[#allocation2 + $0xb0] sm:$0xff] 0.0
    %155 = vst [vmem:[#allocation2 + $0xb8] sm:$0xff] 0.0
    %156 = vst [vmem:[#allocation2 + $0xc0] sm:$0xff] 0.0
    %157 = vst [vmem:[#allocation2 + $0xc8] sm:$0xff] 0.0
    %158 = vst [vmem:[#allocation2 + $0xd0] sm:$0xff] 0.0
    %159 = vst [vmem:[#allocation2 + $0xd8] sm:$0xff] 0.0
    %160 = vst [vmem:[#allocation2 + $0xe0] sm:$0xff] 0.0
    %161 = vst [vmem:[#allocation2 + $0xe8] sm:$0xff] 0.0
    %162 = vst [vmem:[#allocation2 + $0xf0] sm:$0xff] 0.0
    %163 = vst [vmem:[#allocation2 + $0xf8] sm:$0xff] 0.0
    %164 = vst [vmem:[#allocation2 + $0x100] sm:$0xff] 0.0
    %165 = vst [vmem:[#allocation2 + $0x108] sm:$0xff] 0.0
    %166 = vst [vmem:[#allocation2 + $0x110] sm:$0xff] 0.0
    %167 = vst [vmem:[#allocation2 + $0x118] sm:$0xff] 0.0
    %168 = vst [vmem:[#allocation2 + $0x120] sm:$0xff] 0.0
    %169 = vst [vmem:[#allocation2 + $0x128] sm:$0xff] 0.0
    %170 = vst [vmem:[#allocation2 + $0x130] sm:$0xff] 0.0
    %171 = vst [vmem:[#allocation2 + $0x138] sm:$0xff] 0.0
    %172 = vst [vmem:[#allocation2 + $0x140] sm:$0xff] 0.0
    %173 = vst [vmem:[#allocation2 + $0x148] sm:$0xff] 0.0
    %174 = vst [vmem:[#allocation2 + $0x150] sm:$0xff] 0.0
    %175 = vst [vmem:[#allocation2 + $0x158] sm:$0xff] 0.0
    %176 = vst [vmem:[#allocation2 + $0x160] sm:$0xff] 0.0
    %177 = vst [vmem:[#allocation2 + $0x168] sm:$0xff] 0.0
    %178 = vst [vmem:[#allocation2 + $0x170] sm:$0xff] 0.0
    %179 = vst [vmem:[#allocation2 + $0x178] sm:$0xff] 0.0
    %180 = vst [vmem:[#allocation2 + $0x180] sm:$0xff] 0.0
    %181 = vst [vmem:[#allocation2 + $0x188] sm:$0xff] 0.0
    %182 = vst [vmem:[#allocation2 + $0x190] sm:$0xff] 0.0
    %183 = vst [vmem:[#allocation2 + $0x198] sm:$0xff] 0.0
    %184 = vst [vmem:[#allocation2 + $0x1a0] sm:$0xff] 0.0
    %185 = vst [vmem:[#allocation2 + $0x1a8] sm:$0xff] 0.0
    %186 = vst [vmem:[#allocation2 + $0x1b0] sm:$0xff] 0.0
    %187 = vst [vmem:[#allocation2 + $0x1b8] sm:$0xff] 0.0
    %188 = vst [vmem:[#allocation2 + $0x1c0] sm:$0xff] 0.0
    %189 = vst [vmem:[#allocation2 + $0x1c8] sm:$0xff] 0.0
    %190 = vst [vmem:[#allocation2 + $0x1d0] sm:$0xff] 0.0
    %191 = vst [vmem:[#allocation2 + $0x1d8] sm:$0xff] 0.0
    %192 = vst [vmem:[#allocation2 + $0x1e0] sm:$0xff] 0.0
    %193 = vst [vmem:[#allocation2 + $0x1e8] sm:$0xff] 0.0
    %194 = vst [vmem:[#allocation2 + $0x1f0] sm:$0xff] 0.0
    %195 = vst [vmem:[#allocation2 + $0x1f8] sm:$0xff] 0.0
    %196 = vst.msk [vmem:[#allocation2] sm:$0xff] %vm48, %v42
    %197 = vst.msk [vmem:[#allocation2 + $0x10] sm:$0xff] %vm48, %v43
    %198 = vrot.lane.b32.xlu0 %v42, 16
    %v199 = vpop.permute.xlu0 %198
    %200 = vrot.lane.b32.xlu0 %v43, 16
    %v201 = vpop.permute.xlu0 %200
    %vm204 = vcmask 261248
    %205 = vst.msk [vmem:[#allocation2 + $0x20] sm:$0xff] %vm204, %v199
    %206 = vst.msk [vmem:[#allocation2 + $0x30] sm:$0xff] %vm204, %v201
    %207 = vrot.lane.b32.xlu0 %v42, 32
    %v208 = vpop.permute.xlu0 %207
    %209 = vrot.lane.b32.xlu0 %v43, 32
    %v210 = vpop.permute.xlu0 %209
    %vm213 = vcmask 392448
    %214 = vst.msk [vmem:[#allocation2 + $0x40] sm:$0xff] %vm213, %v208
    %215 = vst.msk [vmem:[#allocation2 + $0x50] sm:$0xff] %vm213, %v210
    %216 = vrot.lane.b32.xlu0 %v42, 48
    %v217 = vpop.permute.xlu0 %216
    %218 = vrot.lane.b32.xlu0 %v43, 48
    %v219 = vpop.permute.xlu0 %218
    %vm222 = vcmask 523648
    %223 = vst.msk [vmem:[#allocation2 + $0x60] sm:$0xff] %vm222, %v217
    %224 = vst.msk [vmem:[#allocation2 + $0x70] sm:$0xff] %vm222, %v219
    %225 = vrot.lane.b32.xlu0 %v42, 64
    %v226 = vpop.permute.xlu0 %225
    %227 = vrot.lane.b32.xlu0 %v43, 64
    %v228 = vpop.permute.xlu0 %227
    %vm231 = vcmask 654848
    %232 = vst.msk [vmem:[#allocation2 + $0x80] sm:$0xff] %vm231, %v226
    %233 = vst.msk [vmem:[#allocation2 + $0x90] sm:$0xff] %vm231, %v228
    %234 = vrot.lane.b32.xlu0 %v42, 80
    %v235 = vpop.permute.xlu0 %234
    %236 = vrot.lane.b32.xlu0 %v43, 80
    %v237 = vpop.permute.xlu0 %236
    %vm240 = vcmask 786048
    %241 = vst.msk [vmem:[#allocation2 + $0xa0] sm:$0xff] %vm240, %v235
    %242 = vst.msk [vmem:[#allocation2 + $0xb0] sm:$0xff] %vm240, %v237
    %243 = vrot.lane.b32.xlu0 %v42, 96
    %v244 = vpop.permute.xlu0 %243
    %245 = vrot.lane.b32.xlu0 %v43, 96
    %v246 = vpop.permute.xlu0 %245
    %vm249 = vcmask 917248
    %250 = vst.msk [vmem:[#allocation2 + $0xc0] sm:$0xff] %vm249, %v244
    %251 = vst.msk [vmem:[#allocation2 + $0xd0] sm:$0xff] %vm249, %v246
    %252 = vrot.lane.b32.xlu0 %v42, 112
    %v253 = vpop.permute.xlu0 %252
    %254 = vrot.lane.b32.xlu0 %v43, 112
    %v255 = vpop.permute.xlu0 %254
    %vm258 = vcmask 1048448
    %259 = vst.msk [vmem:[#allocation2 + $0xe0] sm:$0xff] %vm258, %v253
    %260 = vst.msk [vmem:[#allocation2 + $0xf0] sm:$0xff] %vm258, %v255
    %261 = vst.msk [vmem:[#allocation2 + $0x108] sm:$0xff] %vm48, %v42
    %262 = vst.msk [vmem:[#allocation2 + $0x118] sm:$0xff] %vm48, %v43
    %263 = vst.msk [vmem:[#allocation2 + $0x128] sm:$0xff] %vm204, %v199
    %264 = vst.msk [vmem:[#allocation2 + $0x138] sm:$0xff] %vm204, %v201
    %265 = vst.msk [vmem:[#allocation2 + $0x148] sm:$0xff] %vm213, %v208
    %266 = vst.msk [vmem:[#allocation2 + $0x158] sm:$0xff] %vm213, %v210
    %267 = vst.msk [vmem:[#allocation2 + $0x168] sm:$0xff] %vm222, %v217
    %268 = vst.msk [vmem:[#allocation2 + $0x178] sm:$0xff] %vm222, %v219
    %269 = vst.msk [vmem:[#allocation2 + $0x188] sm:$0xff] %vm231, %v226
    %270 = vst.msk [vmem:[#allocation2 + $0x198] sm:$0xff] %vm231, %v228
    %271 = vst.msk [vmem:[#allocation2 + $0x1a8] sm:$0xff] %vm240, %v235
    %272 = vst.msk [vmem:[#allocation2 + $0x1b8] sm:$0xff] %vm240, %v237
    %273 = vst.msk [vmem:[#allocation2 + $0x1c8] sm:$0xff] %vm249, %v244
    %274 = vst.msk [vmem:[#allocation2 + $0x1d8] sm:$0xff] %vm249, %v246
    %275 = vst.msk [vmem:[#allocation2 + $0x1e8] sm:$0xff] %vm258, %v253
    %276 = vst.msk [vmem:[#allocation2 + $0x1f8] sm:$0xff] %vm258, %v255
    %v277 = vld [vmem:[#allocation2] sm:$0xff]
    %v278 = vld [vmem:[#allocation2 + $0x8] sm:$0xff]
    %v279 = vld [vmem:[#allocation2 + $0x10] sm:$0xff]
    %v280 = vld [vmem:[#allocation2 + $0x18] sm:$0xff]
    %v281 = vld [vmem:[#allocation2 + $0x20] sm:$0xff]
    %v282 = vld [vmem:[#allocation2 + $0x28] sm:$0xff]
    %v283 = vld [vmem:[#allocation2 + $0x30] sm:$0xff]
    %v284 = vld [vmem:[#allocation2 + $0x38] sm:$0xff]
    %v285 = vld [vmem:[#allocation2 + $0x40] sm:$0xff]
    %v286 = vld [vmem:[#allocation2 + $0x48] sm:$0xff]
    %v287 = vld [vmem:[#allocation2 + $0x50] sm:$0xff]
    %v288 = vld [vmem:[#allocation2 + $0x58] sm:$0xff]
    %v289 = vld [vmem:[#allocation2 + $0x60] sm:$0xff]
    %v290 = vld [vmem:[#allocation2 + $0x68] sm:$0xff]
    %v291 = vld [vmem:[#allocation2 + $0x70] sm:$0xff]
    %v292 = vld [vmem:[#allocation2 + $0x78] sm:$0xff]
    %v293 = vld [vmem:[#allocation2 + $0x80] sm:$0xff]
    %v294 = vld [vmem:[#allocation2 + $0x88] sm:$0xff]
    %v295 = vld [vmem:[#allocation2 + $0x90] sm:$0xff]
    %v296 = vld [vmem:[#allocation2 + $0x98] sm:$0xff]
    %v297 = vld [vmem:[#allocation2 + $0xa0] sm:$0xff]
    %v298 = vld [vmem:[#allocation2 + $0xa8] sm:$0xff]
    %v299 = vld [vmem:[#allocation2 + $0xb0] sm:$0xff]
    %v300 = vld [vmem:[#allocation2 + $0xb8] sm:$0xff]
    %v301 = vld [vmem:[#allocation2 + $0xc0] sm:$0xff]
    %v302 = vld [vmem:[#allocation2 + $0xc8] sm:$0xff]
    %v303 = vld [vmem:[#allocation2 + $0xd0] sm:$0xff]
    %v304 = vld [vmem:[#allocation2 + $0xd8] sm:$0xff]
    %v305 = vld [vmem:[#allocation2 + $0xe0] sm:$0xff]
    %v306 = vld [vmem:[#allocation2 + $0xe8] sm:$0xff]
    %v307 = vld [vmem:[#allocation2 + $0xf0] sm:$0xff]
    %v308 = vld [vmem:[#allocation2 + $0xf8] sm:$0xff]
    %v309 = vld [vmem:[#allocation2 + $0x100] sm:$0xff]
    %v310 = vld [vmem:[#allocation2 + $0x108] sm:$0xff]
    %v311 = vld [vmem:[#allocation2 + $0x110] sm:$0xff]
    %v312 = vld [vmem:[#allocation2 + $0x118] sm:$0xff]
    %v313 = vld [vmem:[#allocation2 + $0x120] sm:$0xff]
    %v314 = vld [vmem:[#allocation2 + $0x128] sm:$0xff]
    %v315 = vld [vmem:[#allocation2 + $0x130] sm:$0xff]
    %v316 = vld [vmem:[#allocation2 + $0x138] sm:$0xff]
    %v317 = vld [vmem:[#allocation2 + $0x140] sm:$0xff]
    %v318 = vld [vmem:[#allocation2 + $0x148] sm:$0xff]
    %v319 = vld [vmem:[#allocation2 + $0x150] sm:$0xff]
    %v320 = vld [vmem:[#allocation2 + $0x158] sm:$0xff]
    %v321 = vld [vmem:[#allocation2 + $0x160] sm:$0xff]
    %v322 = vld [vmem:[#allocation2 + $0x168] sm:$0xff]
    %v323 = vld [vmem:[#allocation2 + $0x170] sm:$0xff]
    %v324 = vld [vmem:[#allocation2 + $0x178] sm:$0xff]
    %v325 = vld [vmem:[#allocation2 + $0x180] sm:$0xff]
    %v326 = vld [vmem:[#allocation2 + $0x188] sm:$0xff]
    %v327 = vld [vmem:[#allocation2 + $0x190] sm:$0xff]
    %v328 = vld [vmem:[#allocation2 + $0x198] sm:$0xff]
    %v329 = vld [vmem:[#allocation2 + $0x1a0] sm:$0xff]
    %v330 = vld [vmem:[#allocation2 + $0x1a8] sm:$0xff]
    %v331 = vld [vmem:[#allocation2 + $0x1b0] sm:$0xff]
    %v332 = vld [vmem:[#allocation2 + $0x1b8] sm:$0xff]
    %v333 = vld [vmem:[#allocation2 + $0x1c0] sm:$0xff]
    %v334 = vld [vmem:[#allocation2 + $0x1c8] sm:$0xff]
    %v335 = vld [vmem:[#allocation2 + $0x1d0] sm:$0xff]
    %v336 = vld [vmem:[#allocation2 + $0x1d8] sm:$0xff]
    %v337 = vld [vmem:[#allocation2 + $0x1e0] sm:$0xff]
    %v338 = vld [vmem:[#allocation2 + $0x1e8] sm:$0xff]
    %v339 = vld [vmem:[#allocation2 + $0x1f0] sm:$0xff]
    %v340 = vld [vmem:[#allocation2 + $0x1f8] sm:$0xff]
    %341 = vmatprep.subr.mxu0 %v308
    %342 = vmatpush1.xpose.msra.mxu0 %v307
    %343 = vmatprep.subr.mxu0 %v306
    %344 = vmatpush1.xpose.msra.mxu0 %v305
    %345 = vmatprep.subr.mxu0 %v304
    %346 = vmatpush1.xpose.msra.mxu0 %v303
    %347 = vmatprep.subr.mxu0 %v302
    %348 = vmatpush1.xpose.msra.mxu0 %v301
    %349 = vmatprep.subr.mxu0 %v300
    %350 = vmatpush1.xpose.msra.mxu0 %v299
    %351 = vmatprep.subr.mxu0 %v298
    %352 = vmatpush1.xpose.msra.mxu0 %v297
    %353 = vmatprep.subr.mxu0 %v296
    %354 = vmatpush1.xpose.msra.mxu0 %v295
    %355 = vmatprep.subr.mxu0 %v294
    %356 = vmatpush1.xpose.msra.mxu0 %v293
    %357 = vmatprep.subr.mxu0 %v292
    %358 = vmatpush1.xpose.msra.mxu0 %v291
    %359 = vmatprep.subr.mxu0 %v290
    %360 = vmatpush1.xpose.msra.mxu0 %v289
    %361 = vmatprep.subr.mxu0 %v288
    %362 = vmatpush1.xpose.msra.mxu0 %v287
    %363 = vmatprep.subr.mxu0 %v286
    %364 = vmatpush1.xpose.msra.mxu0 %v285
    %365 = vmatprep.subr.mxu0 %v284
    %366 = vmatpush1.xpose.msra.mxu0 %v283
    %367 = vmatprep.subr.mxu0 %v282
    %368 = vmatpush1.xpose.msra.mxu0 %v281
    %369 = vmatprep.subr.mxu0 %v280
    %370 = vmatpush1.xpose.msra.mxu0 %v279
    %371 = vmatprep.subr.mxu0 %v278
    %372 = vmatpush1.xpose.msra.mxu0 %v277
    %373 = vmatprep.subr.mxu0 %v340
    %374 = vmatpush2.xpose.msra.mxu0 %v339
    %375 = vmatprep.subr.mxu0 %v338
    %376 = vmatpush2.xpose.msra.mxu0 %v337
    %377 = vmatprep.subr.mxu0 %v336
    %378 = vmatpush2.xpose.msra.mxu0 %v335
    %379 = vmatprep.subr.mxu0 %v334
    %380 = vmatpush2.xpose.msra.mxu0 %v333
    %381 = vmatprep.subr.mxu0 %v332
    %382 = vmatpush2.xpose.msra.mxu0 %v331
    %383 = vmatprep.subr.mxu0 %v330
    %384 = vmatpush2.xpose.msra.mxu0 %v329
    %385 = vmatprep.subr.mxu0 %v328
    %386 = vmatpush2.xpose.msra.mxu0 %v327
    %387 = vmatprep.subr.mxu0 %v326
    %388 = vmatpush2.xpose.msra.mxu0 %v325
    %389 = vmatprep.subr.mxu0 %v324
    %390 = vmatpush2.xpose.msra.mxu0 %v323
    %391 = vmatprep.subr.mxu0 %v322
    %392 = vmatpush2.xpose.msra.mxu0 %v321
    %393 = vmatprep.subr.mxu0 %v320
    %394 = vmatpush2.xpose.msra.mxu0 %v319
    %395 = vmatprep.subr.mxu0 %v318
    %396 = vmatpush2.xpose.msra.mxu0 %v317
    %397 = vmatprep.subr.mxu0 %v316
    %398 = vmatpush2.xpose.msra.mxu0 %v315
    %399 = vmatprep.subr.mxu0 %v314
    %400 = vmatpush2.xpose.msra.mxu0 %v313
    %401 = vmatprep.subr.mxu0 %v312
    %402 = vmatpush2.xpose.msra.mxu0 %v311
    %403 = vmatprep.subr.mxu0 %v310
    %404 = vmatpush2.xpose.msra.mxu0 %v309
    %405 = vmatprep.mubr.f32.mxu0 %v124
    %406 = vmatmul.mubr.f32.gmra.mxu0 %v122
    %v407 = vpop.f32.mrf.mxu0
    %v408 = vadd.f32 0.0, %v407
    %v409 = vpop.f32.mrf.mxu0
    %v410 = vadd.f32 0.0, %v409
    %411 = vmatprep.mubr.f32.mxu0 %v130
    %412 = vmatmul.mubr.f32.gmra.mxu0 %v128
    %v413 = vpop.f32.mrf.mxu0
    %v414 = vadd.f32 0.0, %v413
    %v415 = vpop.f32.mrf.mxu0
    %v416 = vadd.f32 0.0, %v415
    %417 = vdwg.mxu0
    %v418 = vand.u32 2147483647, %v408
    %v419 = vand.u32 2147483647, %v410
    %v420 = vand.u32 2147483647, %v414
    %v421 = vand.u32 2147483647, %v416
    %v422 = vsub.f32 0.0, %v418
    %v423 = vsub.f32 0.0, %v419
    %v424 = vsub.f32 0.0, %v420
    %v425 = vsub.f32 0.0, %v421
    %426 = vst [vmem:[%s2] sm:$0xff] %v422
    %427 = vst [vmem:[%s2 + $0x8] sm:$0xff] %v423
    %428 = vst [vmem:[%s2 + $0x10] sm:$0xff] %v424
    %429 = vst [vmem:[%s2 + $0x18] sm:$0xff] %v425
    %v430 = vadd.f32 %v408, %v418
    %v431 = vadd.f32 %v410, %v419
    %v432 = vadd.f32 %v414, %v420
    %v433 = vadd.f32 %v416, %v421
    %v434 = vadd.f32 %v430, %v431
    %v435 = vadd.f32 %v434, %v432
    %v436 = vadd.f32 %v435, %v433
    %437 = vadd.xlane.f32.xlu0 %v436
    %v438 = vpop.xlane.xlu0 %437
    %v439 = vrot.slane %v438, 4
    %v440 = vadd.f32 %v438, %v439
    %v441 = vrot.slane %v440, 2
    %v442 = vadd.f32 %v440, %v441
    %v443 = vrot.slane %v442, 1
    %v444 = vadd.f32 %v442, %v443
    %s445 = vtos %v444
    %v446 = vstv %s445
    %vm447 = vcmask 0
    %448 = vst.msk [vmem:[#allocation8] sm:$0x1] %vm447, %v446
    // Predicated region
    $region18: #{_loss_impl.1} parent=1 // pred_check
      _
    $region19: #{_loss_impl.1} parent=1 // pred_check_branch
      %450 = sbr.rel (0) target = $region21
    $region20: #{_loss_impl.1} parent=1 // pred_region
      _
    $region21: #{_loss_impl.1} parent=1 // pred_fallthru
      _
    // Predicated region
    $region22: #{_loss_impl.1} parent=1 // pred_check
      _
    $region23: #{_loss_impl.1} parent=1 // pred_check_branch
      %452 = sbr.rel (0) target = $region25
    $region24: #{_loss_impl.1} parent=1 // pred_region
      %s454 = ssub.s32 16, 16
      %455 = vsyncadd [#allocation5], %s454
      %s457 = sshll.u32 [#allocation8], 4
      %s458 = int_to_ptr.vmem [resolvable:$true] %s457
      %460 = dma.vmem_to_hbm [thread:$0]  %s458, 16, %s3, [#allocation5]
    $region25: #{_loss_impl.1} parent=1 // pred_fallthru
      _
    // Predicated region
    $region26: #{_loss_impl.1} parent=1 // pred_check
      _
    $region27: #{_loss_impl.1} parent=1 // pred_check_branch
      %462 = sbr.rel (0) target = $region29
    $region28: #{_loss_impl.1} parent=1 // pred_region
      _
    $region29: #{_loss_impl.1} parent=1 // pred_fallthru
      _
    // Predicated region
    $region30: #{_loss_impl.1} parent=1 // pred_check
      _
    $region31: #{_loss_impl.1} parent=1 // pred_check_branch
      %464 = sbr.rel (0) target = $region33
    $region32: #{_loss_impl.1} parent=1 // pred_region
      %465 = dma.done [#allocation5], 16
    $region33: #{_loss_impl.1} parent=1 // pred_fallthru
      _
    %466 = vsyncpa [#allocation4], 1
    %467 = vsyncpa [#allocation7], 1
    %468 = vsyncpa [#allocation5], 1

</llo_original>
